<compile_context>
chip_gen: v7x
topology: tpu7x:2x2x1
jax: 0.10.0
libtpu: 0.0.40
codegen_flags: <defaults>
</compile_context>

<pallas_src>
import functools

import jax
import jax.numpy as jnp
from jax import lax
from jax.experimental import pallas as pl
from jax.experimental.pallas import tpu as pltpu


def _relu6(x):
    return jnp.minimum(jnp.maximum(x, 0.0), 6.0)


# ------------------------------------------------------------------------------
# Kernel
# ------------------------------------------------------------------------------
def mobilenet_fuse_kernel(xs_ref, xm_ref, xl_ref,
                          ws_ref, bs_ref, wm_ref, bm_ref, wl_ref, bl_ref,
                          wa_ref, ba_ref, wts_ref, wtm_ref, wtl_ref, bt_ref,
                          out_ref, *, W, c1, Nb):
    f32 = jnp.float32
    HW = out_ref.shape[-1]

    # Border masks built in-kernel from a lane iota (no mask input / HBM read).
    # Hoisted above the image loop: computed once per grid step.
    lane = lax.broadcasted_iota(jnp.int32, (1, HW), 1)
    row_ok = lane >= W                          # source row h-1 >= 0 after roll by W
    if W & (W - 1) == 0:                        # w != 0  (power-of-two fast path)
        col_ok = (lane & (W - 1)) != 0
    else:                                       # float mod, exact for HW < 2**24
        lane_f = lane.astype(f32)
        col_ok = (lane_f - W * jnp.floor(lane_f / W)) > 0.5

    # Weights are tiny; load once per grid step, outside the image loop.
    ws = ws_ref[...]; bs = bs_ref[...]
    wm = wm_ref[...]; bm = bm_ref[...]
    wl = wl_ref[...]; bl = bl_ref[...]
    wa = wa_ref[...]; ba = ba_ref[...]
    wts = wts_ref[...]; wtm = wtm_ref[...]; wtl = wtl_ref[...]
    bt = bt_ref[...]

    for b in range(Nb):                         # static unroll over images in block
        xs = xs_ref[b].astype(f32)              # (c0,   HW) bf16 -> f32 (VPU)
        xm = xm_ref[b]                          # (c1,   HW) f32
        s2d = xl_ref[b].astype(f32)             # (4*c2, HW) bf16 -> f32

        # --- three ConvBNReLU branches (BN folded into weight/bias) -----------
        small = _relu6(jnp.dot(ws, xs, preferred_element_type=f32) + bs)   # (c1,HW)
        mid = _relu6(jnp.dot(wm, xm, preferred_element_type=f32) + bm)     # (c1,HW)

        # 3x3 stride-2 conv on the 2x2 phase decomposition: one stacked matmul,
        # then move the h-1 / w-1 tap groups with XLU lane rolls + border masks
        # (no concatenate / unaligned-slice VMEM round trips).
        # NOTE: the t[k*c1:(k+1)*c1] sublane slices are tile-aligned for c1 % 8 == 0.
        t = jnp.dot(wl, s2d, preferred_element_type=f32)                   # (4c1,HW)
        t_a = t[0 * c1:1 * c1]          # source (h,   w)
        t_b = t[1 * c1:2 * c1]          # source (h-1, w)   -> roll by W
        t_c = t[2 * c1:3 * c1]          # source (h,   w-1) -> roll by 1
        t_d = t[3 * c1:4 * c1]          # source (h-1, w-1) -> roll by W+1
        from_up = jnp.where(row_ok, pltpu.roll(t_b, W, axis=1), 0.0)
        from_left = jnp.where(
            col_ok,
            pltpu.roll(t_c, 1, axis=1)
            + jnp.where(row_ok, pltpu.roll(t_d, W + 1, axis=1), 0.0),
            0.0)
        large = _relu6(t_a + from_up + from_left + bl)                     # (c1,HW)

        # --- attention: att_small reused on all three branches (as in the module)
        att_s = _relu6(jnp.dot(wa, small, preferred_element_type=f32) + ba)
        att_m = _relu6(jnp.dot(wa, mid, preferred_element_type=f32) + ba)
        att_l = _relu6(jnp.dot(wa, large, preferred_element_type=f32) + ba)
        logits = (jnp.dot(wts, att_s, preferred_element_type=f32)
                  + jnp.dot(wtm, att_m, preferred_element_type=f32)
                  + jnp.dot(wtl, att_l, preferred_element_type=f32)
                  + bt)                                                    # (3, HW)

        # 2 * softmax over the 3 rows, elementwise (VPU) + EUP approx reciprocal.
        l0, l1, l2 = logits[0:1], logits[1:2], logits[2:3]
        mx = jnp.maximum(jnp.maximum(l0, l1), l2)
        e0 = jnp.exp(l0 - mx)
        e1 = jnp.exp(l1 - mx)
        e2 = jnp.exp(l2 - mx)
        two_over_sum = 2.0 * pl.reciprocal(e0 + e1 + e2, approx=True)

        fused = (small * (e0 * two_over_sum)
                 + mid * (e1 * two_over_sum)
                 + large * (e2 * two_over_sum))
        out_ref[b] = fused.astype(out_ref.dtype)


# ------------------------------------------------------------------------------
# Glue: layout prep (free reshapes + two XLA passes fused with the bf16 cast)
# ------------------------------------------------------------------------------
def _preprocess(small_nchw, mid_nchw, large_nchw, act_dtype=jnp.bfloat16):
    N, c0, _, _ = small_nchw.shape
    _, c1, H, W = mid_nchw.shape
    _, c2, _, _ = large_nchw.shape

    # Nearest upsample x2 commutes exactly with the 1x1 conv/BN/ReLU6; the repeat
    # and the bf16 cast fuse into one XLA copy pass (read f32 once, write bf16).
    small_up = jnp.repeat(jnp.repeat(small_nchw, 2, axis=2), 2, axis=3)
    xs = small_up.reshape(N, c0, H * W).astype(act_dtype)

    xm = mid_nchw.reshape(N, c1, H * W)            # free reshape, read as f32

    # Space-to-depth (2x2 phase split) of the large input, fused with the bf16
    # cast into a single read(f32)+write(bf16) pass (half of v2's repack traffic).
    # Channel order (p,q) = (0,0),(0,1),(1,0),(1,1);  X_pq[h,w] = X[2h+p, 2w+q].
    xl = large_nchw.reshape(N, c2, H, 2, W, 2)
    xl = jnp.transpose(xl, (0, 3, 5, 1, 2, 4)).reshape(N, 4 * c2, H * W)
    xl = xl.astype(act_dtype)
    return xs, xm, xl


def _plan(N, c0, c1, c2, HW):
    """Pick images-per-step (Nb) and an honest VMEM limit (in/out double-buffers
    + per-image f32 intermediates + weights, which the v2 heuristic ignored)."""
    in_b = HW * (2 * c0 + 4 * c1 + 2 * 4 * c2)         # xs bf16, xm f32, xl bf16
    out_b = HW * 4 * c1                                # f32 output block
    # live f32 intermediates per image: t(4c1) + branches/rolled temps(~6c1)
    # + f32 copies of the bf16 inputs (c0 + 4c2) + att rows + slack.
    inter_b = HW * 4 * (10 * c1 + c0 + 4 * c2 + 3 * 8 + 16)
    w_b = 4 * (c1 * c0 + c1 * c1 + 16 * c1 * c2 + 8 * c1 + 3 * 24 + 7 * c1 + 16)

    try:
        cap = int(pltpu.get_tpu_info().vmem_capacity_bytes)
    except Exception:
        cap = 64 * 1024 * 1024                         # v7x per-core worst case
    budget = int(0.70 * cap)

    def step_bytes(nb):
        return 2 * nb * (in_b + out_b) + nb * inter_b + 2 * w_b

    divisors = [d for d in range(1, N + 1) if N % d == 0]
    fitting = [d for d in divisors if step_bytes(d) <= budget] or [1]
    # Smallest block already moving >= ~1 MiB/step (amortises per-step pipeline
    # overhead at small HW), otherwise the largest block that fits VMEM.
    Nb = next((d for d in fitting if d * (in_b + out_b) >= (1 << 20)), fitting[-1])
    # TODO(synk): if step_bytes(1) > budget (huge feature maps, esp. v7x 64 MiB),
    # spatially tile along H with a one-row halo instead of per-image blocks.
    vmem_limit = int(min(int(0.90 * cap), max(32 * 1024 * 1024, 2 * step_bytes(Nb))))
    return Nb, vmem_limit


def mobilenet_fuse(small_nchw, mid_nchw, large_nchw, p, out_dtype=jnp.float32):
    N, c1, H, W = mid_nchw.shape
    c0 = small_nchw.shape[1]
    c2 = large_nchw.shape[1]
    HW = H * W

    xs, xm, xl = _preprocess(small_nchw, mid_nchw, large_nchw)
    Nb, vmem_limit = _plan(N, c0, c1, c2, HW)

    data = lambda C: pl.BlockSpec((Nb, C, HW), lambda i: (i, 0, 0))
    const = lambda shape: pl.BlockSpec(shape, lambda i: (0, 0))

    flops = 2 * N * HW * (c0 * c1 + c1 * c1 + (4 * c2) * (4 * c1)
                          + 3 * 8 * c1 + 3 * 3 * 8)
    bytes_accessed = int(N * HW * (2 * c0 + 4 * c1 + 2 * 4 * c2 + 4 * c1))
    cost = pl.CostEstimate(flops=flops, transcendentals=3 * N * HW,
                           bytes_accessed=bytes_accessed)

    out_flat = pl.pallas_call(
        functools.partial(mobilenet_fuse_kernel, W=W, c1=c1, Nb=Nb),
        out_shape=jax.ShapeDtypeStruct((N, c1, HW), out_dtype),
        grid_spec=pltpu.PrefetchScalarGridSpec(
            num_scalar_prefetch=0,
            grid=(N // Nb,),
            in_specs=[
                data(c0), data(c1), data(4 * c2),
                const((c1, c0)), const((c1, 1)),
                const((c1, c1)), const((c1, 1)),
                const((4 * c1, 4 * c2)), const((c1, 1)),
                const((8, c1)), const((8, 1)),
                const((3, 8)), const((3, 8)), const((3, 8)), const((3, 1)),
            ],
            out_specs=data(c1)),
        compiler_params=pltpu.CompilerParams(
            dimension_semantics=("parallel",),
            vmem_limit_bytes=vmem_limit),
        cost_estimate=cost,
    )(xs, xm, xl,
      p['ws'], p['bs'], p['wm'], p['bm'], p['wl'], p['bl'],
      p['wa'], p['ba'], p['wts'], p['wtm'], p['wtl'], p['bt'])

    return out_flat.reshape(N, c1, H, W)


# ------------------------------------------------------------------------------
# Parameters: raw (PyTorch-layout) synthetic params + packing for the kernel
# ------------------------------------------------------------------------------
def make_raw_params(key, chanels):
    c0, c1, c2 = chanels
    ks = jax.random.split(key, 6)

    def conv_bn(k, cin, cout, ksz):
        k1, k2, k3, k4, k5 = jax.random.split(k, 5)
        w = jax.random.normal(k1, (cout, cin, ksz, ksz), jnp.float32) * 0.1
        gamma = jax.random.uniform(k2, (cout,), jnp.float32, 0.5, 1.5)
        beta = jax.random.normal(k3, (cout,), jnp.float32) * 0.1
        mean = jax.random.normal(k4, (cout,), jnp.float32) * 0.1
        var = jax.random.uniform(k5, (cout,), jnp.float32, 0.5, 1.5)
        return w, (gamma, beta, mean, var)

    small_w, small_bn = conv_bn(ks[0], c0, c1, 1)
    mid_w, mid_bn = conv_bn(ks[1], c1, c1, 1)
    large_w, large_bn = conv_bn(ks[2], c2, c1, 3)
    att_w, att_bn = conv_bn(ks[3], c1, 8, 1)      # att_small (reused 3x in fwd)
    ka, kb = jax.random.split(ks[4])
    attn_w = jax.random.normal(ka, (3, 24, 1, 1), jnp.float32) * 0.1
    attn_b = jax.random.normal(kb, (3,), jnp.float32) * 0.1
    return dict(small_w=small_w, small_bn=small_bn, mid_w=mid_w, mid_bn=mid_bn,
                large_w=large_w, large_bn=large_bn, att_w=att_w, att_bn=att_bn,
                attn_w=attn_w, attn_b=attn_b)


def _fold_bn(w, bn, eps=1e-5):
    gamma, beta, mean, var = bn
    scale = gamma / jnp.sqrt(var + eps)
    return w * scale[:, None, None, None], beta - mean * scale


def pack_params(raw, chanels):
    """Fold BN (exact, eps=1e-5) and repack for the channel-major fused kernel."""
    c0, c1, c2 = chanels

    ws4, bs = _fold_bn(raw['small_w'], raw['small_bn'])      # (c1, c0, 1, 1)
    wm4, bm = _fold_bn(raw['mid_w'], raw['mid_bn'])          # (c1, c1, 1, 1)
    wl4, bl = _fold_bn(raw['large_w'], raw['large_bn'])      # (c1, c2, 3, 3)
    wa4, ba = _fold_bn(raw['att_w'], raw['att_bn'])          # (8,  c1, 1, 1)

    ws = ws4[:, :, 0, 0]                                     # (c1, c0)
    wm = wm4[:, :, 0, 0]                                     # (c1, c1)
    wa = wa4[:, :, 0, 0]                                     # (8,  c1)

    # 3x3 stride-2 conv regrouped on the 2x2 phase decomposition (channel order
    # (0,0),(0,1),(1,0),(1,1)).  Groups: A = no shift, B = source (h-1, w),
    # C = source (h, w-1), D = source (h-1, w-1).
    tap = lambda ki, kj: wl4[:, :, ki, kj]                   # (c1, c2)
    z = jnp.zeros((c1, c2), jnp.float32)
    w_a = jnp.concatenate([tap(1, 1), tap(1, 2), tap(2, 1), tap(2, 2)], axis=1)
    w_b = jnp.concatenate([z,         z,         tap(0, 1), tap(0, 2)], axis=1)
    w_c = jnp.concatenate([z,         tap(1, 0), z,         tap(2, 0)], axis=1)
    w_d = jnp.concatenate([z,         z,         z,         tap(0, 0)], axis=1)
    wl = jnp.concatenate([w_a, w_b, w_c, w_d], axis=0)       # (4*c1, 4*c2)

    wt = raw['attn_w'][:, :, 0, 0]                           # (3, 24): small|mid|large
    wts, wtm, wtl = wt[:, 0:8], wt[:, 8:16], wt[:, 16:24]

    return dict(ws=ws, bs=bs[:, None], wm=wm, bm=bm[:, None],
                wl=wl, bl=bl[:, None], wa=wa, ba=ba[:, None],
                wts=wts, wtm=wtm, wtl=wtl, bt=raw['attn_b'][:, None])


# ------------------------------------------------------------------------------
# Pure-JAX reference (literal translation of the PyTorch forward, NCHW convs)
# ------------------------------------------------------------------------------
def reference(small, mid, large, raw):
    def cbr(x, w, bn, stride, pad):
        y = jax.lax.conv_general_dilated(
            x, w, window_strides=(stride, stride),
            padding=[(pad, pad), (pad, pad)],
            dimension_numbers=('NCHW', 'OIHW', 'NCHW'))
        gamma, beta, mean, var = bn
        scale = gamma / jnp.sqrt(var + 1e-5)
        y = y * scale[None, :, None, None] + (beta - mean * scale)[None, :, None, None]
        return jnp.clip(y, 0.0, 6.0)

    s = cbr(small, raw['small_w'], raw['small_bn'], 1, 0)
    s = jnp.repeat(jnp.repeat(s, 2, axis=2), 2, axis=3)       # nearest upsample x2
    m = cbr(mid, raw['mid_w'], raw['mid_bn'], 1, 0)
    l = cbr(large, raw['large_w'], raw['large_bn'], 2, 1)
    a_s = cbr(s, raw['att_w'], raw['att_bn'], 1, 0)
    a_m = cbr(m, raw['att_w'], raw['att_bn'], 1, 0)
    a_l = cbr(l, raw['att_w'], raw['att_bn'], 1, 0)
    feat = jnp.concatenate([a_s, a_m, a_l], axis=1)
    logits = jax.lax.conv_general_dilated(
        feat, raw['attn_w'], (1, 1), [(0, 0), (0, 0)],
        dimension_numbers=('NCHW', 'OIHW', 'NCHW')) + raw['attn_b'][None, :, None, None]
    attn = 2.0 * jax.nn.softmax(logits, axis=1)
    return s * attn[:, 0:1] + m * attn[:, 1:2] + l * attn[:, 2:3]


if __name__ == "__main__":
    key = jax.random.PRNGKey(0)
    chanels = [4, 8, 6]            # (c_small_in, c_common, c_large_in)
    N, H, W = 2, 16, 16            # mid/output spatial; small = H/2, large = 2H

    k1, k2, k3, kp = jax.random.split(key, 4)
    small = jax.random.normal(k1, (N, chanels[0], H // 2, W // 2), jnp.float32)
    mid = jax.random.normal(k2, (N, chanels[1], H, W), jnp.float32)
    large = jax.random.normal(k3, (N, chanels[2], 2 * H, 2 * W), jnp.float32)

    raw = make_raw_params(kp, chanels)
    params = pack_params(raw, chanels)

    fuse = jax.jit(mobilenet_fuse)
    out = jax.block_until_ready(fuse(small, mid, large, params))
    assert out.shape == (N, chanels[1], H, W)

    ref = jax.block_until_ready(reference(small, mid, large, raw))
    max_err = float(jnp.max(jnp.abs(out - ref)))
    if max_err > 0.05:
        raise RuntimeError(f"mismatch vs reference: max_err={max_err}")
    print("KERNEL_OK")
</pallas_src>

<mosaic_0001>
module attributes {stable_mosaic.version = 11 : i64} {
  func.func @mobilenet_fuse_kernel(%arg0: i32, %arg1: memref<2x4x256xbf16, #tpu.memory_space<vmem>>, %arg2: memref<2x8x256xf32, #tpu.memory_space<vmem>>, %arg3: memref<2x24x256xbf16, #tpu.memory_space<vmem>>, %arg4: memref<8x4xf32, #tpu.memory_space<vmem>>, %arg5: memref<8x1xf32, #tpu.memory_space<vmem>>, %arg6: memref<8x8xf32, #tpu.memory_space<vmem>>, %arg7: memref<8x1xf32, #tpu.memory_space<vmem>>, %arg8: memref<32x24xf32, #tpu.memory_space<vmem>>, %arg9: memref<8x1xf32, #tpu.memory_space<vmem>>, %arg10: memref<8x8xf32, #tpu.memory_space<vmem>>, %arg11: memref<8x1xf32, #tpu.memory_space<vmem>>, %arg12: memref<3x8xf32, #tpu.memory_space<vmem>>, %arg13: memref<3x8xf32, #tpu.memory_space<vmem>>, %arg14: memref<3x8xf32, #tpu.memory_space<vmem>>, %arg15: memref<3x1xf32, #tpu.memory_space<vmem>>, %arg16: memref<2x8x256xf32, #tpu.memory_space<vmem>>) attributes {dimension_semantics = [#tpu.dimension_semantics<parallel>], iteration_bounds = array<i64: 1>, scalar_prefetch = 0 : i64, scratch_operands = 0 : i64, tpu.core_type = #tpu.core_type<tc>, window_params = [{transform_indices = @transform_0, window_bounds = array<i64: 2, 4, 256>}, {transform_indices = @transform_1, window_bounds = array<i64: 2, 8, 256>}, {transform_indices = @transform_2, window_bounds = array<i64: 2, 24, 256>}, {pipeline_mode = #tpu.pipeline_mode<synchronous>, transform_indices = @transform_3, window_bounds = array<i64: 8, 4>}, {pipeline_mode = #tpu.pipeline_mode<synchronous>, transform_indices = @transform_4, window_bounds = array<i64: 8, 1>}, {pipeline_mode = #tpu.pipeline_mode<synchronous>, transform_indices = @transform_5, window_bounds = array<i64: 8, 8>}, {pipeline_mode = #tpu.pipeline_mode<synchronous>, transform_indices = @transform_6, window_bounds = array<i64: 8, 1>}, {pipeline_mode = #tpu.pipeline_mode<synchronous>, transform_indices = @transform_7, window_bounds = array<i64: 32, 24>}, {pipeline_mode = #tpu.pipeline_mode<synchronous>, transform_indices = @transform_8, window_bounds = array<i64: 8, 1>}, {pipeline_mode = #tpu.pipeline_mode<synchronous>, transform_indices = @transform_9, window_bounds = array<i64: 8, 8>}, {pipeline_mode = #tpu.pipeline_mode<synchronous>, transform_indices = @transform_10, window_bounds = array<i64: 8, 1>}, {pipeline_mode = #tpu.pipeline_mode<synchronous>, transform_indices = @transform_11, window_bounds = array<i64: 3, 8>}, {pipeline_mode = #tpu.pipeline_mode<synchronous>, transform_indices = @transform_12, window_bounds = array<i64: 3, 8>}, {pipeline_mode = #tpu.pipeline_mode<synchronous>, transform_indices = @transform_13, window_bounds = array<i64: 3, 8>}, {pipeline_mode = #tpu.pipeline_mode<synchronous>, transform_indices = @transform_14, window_bounds = array<i64: 3, 1>}, {transform_indices = @transform_15, window_bounds = array<i64: 2, 8, 256>}]} {
    %0 = tpu.iota {dimensions = array<i32: 1>} : vector<1x256xi32>
    %c16_i32 = arith.constant 16 : i32
    %1 = vector.broadcast %c16_i32 : i32 to vector<1x256xi32>
    %2 = arith.cmpi sge, %0, %1 : vector<1x256xi32>
    %c15_i32 = arith.constant 15 : i32
    %3 = vector.broadcast %c15_i32 : i32 to vector<1x256xi32>
    %4 = arith.andi %0, %3 : vector<1x256xi32>
    %c0_i32 = arith.constant 0 : i32
    %5 = vector.broadcast %c0_i32 : i32 to vector<1x256xi32>
    %6 = arith.cmpi ne, %4, %5 : vector<1x256xi32>
    %c0 = arith.constant 0 : index
    %c0_0 = arith.constant 0 : index
    %7 = vector.load %arg4[%c0, %c0_0] : memref<8x4xf32, #tpu.memory_space<vmem>>, vector<8x4xf32>
    %c0_1 = arith.constant 0 : index
    %c0_2 = arith.constant 0 : index
    %8 = vector.load %arg5[%c0_1, %c0_2] : memref<8x1xf32, #tpu.memory_space<vmem>>, vector<8x1xf32>
    %c0_3 = arith.constant 0 : index
    %c0_4 = arith.constant 0 : index
    %9 = vector.load %arg6[%c0_3, %c0_4] : memref<8x8xf32, #tpu.memory_space<vmem>>, vector<8x8xf32>
    %c0_5 = arith.constant 0 : index
    %c0_6 = arith.constant 0 : index
    %10 = vector.load %arg7[%c0_5, %c0_6] : memref<8x1xf32, #tpu.memory_space<vmem>>, vector<8x1xf32>
    %c0_7 = arith.constant 0 : index
    %c0_8 = arith.constant 0 : index
    %11 = vector.load %arg8[%c0_7, %c0_8] : memref<32x24xf32, #tpu.memory_space<vmem>>, vector<32x24xf32>
    %c0_9 = arith.constant 0 : index
    %c0_10 = arith.constant 0 : index
    %12 = vector.load %arg9[%c0_9, %c0_10] : memref<8x1xf32, #tpu.memory_space<vmem>>, vector<8x1xf32>
    %c0_11 = arith.constant 0 : index
    %c0_12 = arith.constant 0 : index
    %13 = vector.load %arg10[%c0_11, %c0_12] : memref<8x8xf32, #tpu.memory_space<vmem>>, vector<8x8xf32>
    %c0_13 = arith.constant 0 : index
    %c0_14 = arith.constant 0 : index
    %14 = vector.load %arg11[%c0_13, %c0_14] : memref<8x1xf32, #tpu.memory_space<vmem>>, vector<8x1xf32>
    %c0_15 = arith.constant 0 : index
    %c0_16 = arith.constant 0 : index
    %15 = vector.load %arg12[%c0_15, %c0_16] : memref<3x8xf32, #tpu.memory_space<vmem>>, vector<3x8xf32>
    %c0_17 = arith.constant 0 : index
    %c0_18 = arith.constant 0 : index
    %16 = vector.load %arg13[%c0_17, %c0_18] : memref<3x8xf32, #tpu.memory_space<vmem>>, vector<3x8xf32>
    %c0_19 = arith.constant 0 : index
    %c0_20 = arith.constant 0 : index
    %17 = vector.load %arg14[%c0_19, %c0_20] : memref<3x8xf32, #tpu.memory_space<vmem>>, vector<3x8xf32>
    %c0_21 = arith.constant 0 : index
    %c0_22 = arith.constant 0 : index
    %18 = vector.load %arg15[%c0_21, %c0_22] : memref<3x1xf32, #tpu.memory_space<vmem>>, vector<3x1xf32>
    %c0_23 = arith.constant 0 : index
    %c0_24 = arith.constant 0 : index
    %c0_25 = arith.constant 0 : index
    %19 = vector.load %arg1[%c0_23, %c0_24, %c0_25] : memref<2x4x256xbf16, #tpu.memory_space<vmem>>, vector<1x4x256xbf16>
    %20 = vector.shape_cast %19 : vector<1x4x256xbf16> to vector<4x256xbf16>
    %21 = arith.extf %20 : vector<4x256xbf16> to vector<4x256xf32>
    %c0_26 = arith.constant 0 : index
    %c0_27 = arith.constant 0 : index
    %c0_28 = arith.constant 0 : index
    %22 = vector.load %arg2[%c0_26, %c0_27, %c0_28] : memref<2x8x256xf32, #tpu.memory_space<vmem>>, vector<1x8x256xf32>
    %23 = vector.shape_cast %22 : vector<1x8x256xf32> to vector<8x256xf32>
    %c0_29 = arith.constant 0 : index
    %c0_30 = arith.constant 0 : index
    %c0_31 = arith.constant 0 : index
    %24 = vector.load %arg3[%c0_29, %c0_30, %c0_31] : memref<2x24x256xbf16, #tpu.memory_space<vmem>>, vector<1x24x256xbf16>
    %25 = vector.shape_cast %24 : vector<1x24x256xbf16> to vector<24x256xbf16>
    %26 = arith.extf %25 : vector<24x256xbf16> to vector<24x256xf32>
    %cst = arith.constant dense<0.000000e+00> : vector<8x256xf32>
    %27 = tpu.matmul %7, %21, %cst {dimension_numbers = #tpu.dot_dimension_numbers<[1], [0], [0], [1], [0, 0, 1, 1], [], []>} : vector<8x4xf32>, vector<4x256xf32>, vector<8x256xf32> -> vector<8x256xf32>
    %28 = vector.broadcast %8 : vector<8x1xf32> to vector<8x256xf32>
    %29 = arith.addf %27, %28 : vector<8x256xf32>
    %cst_32 = arith.constant 0.000000e+00 : f32
    %30 = vector.broadcast %cst_32 : f32 to vector<8x256xf32>
    %31 = arith.maximumf %29, %30 : vector<8x256xf32>
    %cst_33 = arith.constant 6.000000e+00 : f32
    %32 = vector.broadcast %cst_33 : f32 to vector<8x256xf32>
    %33 = arith.minimumf %31, %32 : vector<8x256xf32>
    %cst_34 = arith.constant dense<0.000000e+00> : vector<8x256xf32>
    %34 = tpu.matmul %9, %23, %cst_34 {dimension_numbers = #tpu.dot_dimension_numbers<[1], [0], [0], [1], [0, 0, 1, 1], [], []>} : vector<8x8xf32>, vector<8x256xf32>, vector<8x256xf32> -> vector<8x256xf32>
    %35 = vector.broadcast %10 : vector<8x1xf32> to vector<8x256xf32>
    %36 = arith.addf %34, %35 : vector<8x256xf32>
    %cst_35 = arith.constant 0.000000e+00 : f32
    %37 = vector.broadcast %cst_35 : f32 to vector<8x256xf32>
    %38 = arith.maximumf %36, %37 : vector<8x256xf32>
    %cst_36 = arith.constant 6.000000e+00 : f32
    %39 = vector.broadcast %cst_36 : f32 to vector<8x256xf32>
    %40 = arith.minimumf %38, %39 : vector<8x256xf32>
    %cst_37 = arith.constant dense<0.000000e+00> : vector<32x256xf32>
    %41 = tpu.matmul %11, %26, %cst_37 {dimension_numbers = #tpu.dot_dimension_numbers<[1], [0], [0], [1], [0, 0, 1, 1], [], []>} : vector<32x24xf32>, vector<24x256xf32>, vector<32x256xf32> -> vector<32x256xf32>
    %42 = vector.extract_strided_slice %41 {offsets = [0, 0], sizes = [8, 256], strides = [1, 1]} : vector<32x256xf32> to vector<8x256xf32>
    %43 = vector.extract_strided_slice %41 {offsets = [8, 0], sizes = [8, 256], strides = [1, 1]} : vector<32x256xf32> to vector<8x256xf32>
    %44 = vector.extract_strided_slice %41 {offsets = [16, 0], sizes = [8, 256], strides = [1, 1]} : vector<32x256xf32> to vector<8x256xf32>
    %45 = vector.extract_strided_slice %41 {offsets = [24, 0], sizes = [8, 256], strides = [1, 1]} : vector<32x256xf32> to vector<8x256xf32>
    %c16_i32_38 = arith.constant 16 : i32
    %46 = tpu.dynamic_rotate %43 by %c16_i32_38 dim 1 : vector<8x256xf32>, i32 -> vector<8x256xf32>
    %cst_39 = arith.constant 0.000000e+00 : f32
    %47 = vector.shape_cast %2 : vector<1x256xi1> to vector<1x256xi1>
    %48 = vector.broadcast %47 : vector<1x256xi1> to vector<8x256xi1>
    %49 = vector.broadcast %cst_39 : f32 to vector<8x256xf32>
    %50 = arith.select %48, %46, %49 : vector<8x256xi1>, vector<8x256xf32>
    %c1_i32 = arith.constant 1 : i32
    %51 = tpu.dynamic_rotate %44 by %c1_i32 dim 1 : vector<8x256xf32>, i32 -> vector<8x256xf32>
    %c17_i32 = arith.constant 17 : i32
    %52 = tpu.dynamic_rotate %45 by %c17_i32 dim 1 : vector<8x256xf32>, i32 -> vector<8x256xf32>
    %cst_40 = arith.constant 0.000000e+00 : f32
    %53 = vector.shape_cast %2 : vector<1x256xi1> to vector<1x256xi1>
    %54 = vector.broadcast %53 : vector<1x256xi1> to vector<8x256xi1>
    %55 = vector.broadcast %cst_40 : f32 to vector<8x256xf32>
    %56 = arith.select %54, %52, %55 : vector<8x256xi1>, vector<8x256xf32>
    %57 = arith.addf %51, %56 : vector<8x256xf32>
    %cst_41 = arith.constant 0.000000e+00 : f32
    %58 = vector.shape_cast %6 : vector<1x256xi1> to vector<1x256xi1>
    %59 = vector.broadcast %58 : vector<1x256xi1> to vector<8x256xi1>
    %60 = vector.broadcast %cst_41 : f32 to vector<8x256xf32>
    %61 = arith.select %59, %57, %60 : vector<8x256xi1>, vector<8x256xf32>
    %62 = arith.addf %42, %50 : vector<8x256xf32>
    %63 = arith.addf %62, %61 : vector<8x256xf32>
    %64 = vector.broadcast %12 : vector<8x1xf32> to vector<8x256xf32>
    %65 = arith.addf %63, %64 : vector<8x256xf32>
    %cst_42 = arith.constant 0.000000e+00 : f32
    %66 = vector.broadcast %cst_42 : f32 to vector<8x256xf32>
    %67 = arith.maximumf %65, %66 : vector<8x256xf32>
    %cst_43 = arith.constant 6.000000e+00 : f32
    %68 = vector.broadcast %cst_43 : f32 to vector<8x256xf32>
    %69 = arith.minimumf %67, %68 : vector<8x256xf32>
    %cst_44 = arith.constant dense<0.000000e+00> : vector<8x256xf32>
    %70 = tpu.matmul %13, %33, %cst_44 {dimension_numbers = #tpu.dot_dimension_numbers<[1], [0], [0], [1], [0, 0, 1, 1], [], []>} : vector<8x8xf32>, vector<8x256xf32>, vector<8x256xf32> -> vector<8x256xf32>
    %71 = vector.broadcast %14 : vector<8x1xf32> to vector<8x256xf32>
    %72 = arith.addf %70, %71 : vector<8x256xf32>
    %cst_45 = arith.constant 0.000000e+00 : f32
    %73 = vector.broadcast %cst_45 : f32 to vector<8x256xf32>
    %74 = arith.maximumf %72, %73 : vector<8x256xf32>
    %cst_46 = arith.constant 6.000000e+00 : f32
    %75 = vector.broadcast %cst_46 : f32 to vector<8x256xf32>
    %76 = arith.minimumf %74, %75 : vector<8x256xf32>
    %cst_47 = arith.constant dense<0.000000e+00> : vector<8x256xf32>
    %77 = tpu.matmul %13, %40, %cst_47 {dimension_numbers = #tpu.dot_dimension_numbers<[1], [0], [0], [1], [0, 0, 1, 1], [], []>} : vector<8x8xf32>, vector<8x256xf32>, vector<8x256xf32> -> vector<8x256xf32>
    %78 = vector.broadcast %14 : vector<8x1xf32> to vector<8x256xf32>
    %79 = arith.addf %77, %78 : vector<8x256xf32>
    %cst_48 = arith.constant 0.000000e+00 : f32
    %80 = vector.broadcast %cst_48 : f32 to vector<8x256xf32>
    %81 = arith.maximumf %79, %80 : vector<8x256xf32>
    %cst_49 = arith.constant 6.000000e+00 : f32
    %82 = vector.broadcast %cst_49 : f32 to vector<8x256xf32>
    %83 = arith.minimumf %81, %82 : vector<8x256xf32>
    %cst_50 = arith.constant dense<0.000000e+00> : vector<8x256xf32>
    %84 = tpu.matmul %13, %69, %cst_50 {dimension_numbers = #tpu.dot_dimension_numbers<[1], [0], [0], [1], [0, 0, 1, 1], [], []>} : vector<8x8xf32>, vector<8x256xf32>, vector<8x256xf32> -> vector<8x256xf32>
    %85 = vector.broadcast %14 : vector<8x1xf32> to vector<8x256xf32>
    %86 = arith.addf %84, %85 : vector<8x256xf32>
    %cst_51 = arith.constant 0.000000e+00 : f32
    %87 = vector.broadcast %cst_51 : f32 to vector<8x256xf32>
    %88 = arith.maximumf %86, %87 : vector<8x256xf32>
    %cst_52 = arith.constant 6.000000e+00 : f32
    %89 = vector.broadcast %cst_52 : f32 to vector<8x256xf32>
    %90 = arith.minimumf %88, %89 : vector<8x256xf32>
    %cst_53 = arith.constant dense<0.000000e+00> : vector<3x256xf32>
    %91 = tpu.matmul %15, %76, %cst_53 {dimension_numbers = #tpu.dot_dimension_numbers<[1], [0], [0], [1], [0, 0, 1, 1], [], []>} : vector<3x8xf32>, vector<8x256xf32>, vector<3x256xf32> -> vector<3x256xf32>
    %cst_54 = arith.constant dense<0.000000e+00> : vector<3x256xf32>
    %92 = tpu.matmul %16, %83, %cst_54 {dimension_numbers = #tpu.dot_dimension_numbers<[1], [0], [0], [1], [0, 0, 1, 1], [], []>} : vector<3x8xf32>, vector<8x256xf32>, vector<3x256xf32> -> vector<3x256xf32>
    %93 = arith.addf %91, %92 : vector<3x256xf32>
    %cst_55 = arith.constant dense<0.000000e+00> : vector<3x256xf32>
    %94 = tpu.matmul %17, %90, %cst_55 {dimension_numbers = #tpu.dot_dimension_numbers<[1], [0], [0], [1], [0, 0, 1, 1], [], []>} : vector<3x8xf32>, vector<8x256xf32>, vector<3x256xf32> -> vector<3x256xf32>
    %95 = arith.addf %93, %94 : vector<3x256xf32>
    %96 = vector.broadcast %18 : vector<3x1xf32> to vector<3x256xf32>
    %97 = arith.addf %95, %96 : vector<3x256xf32>
    %98 = vector.extract_strided_slice %97 {offsets = [0, 0], sizes = [1, 256], strides = [1, 1]} : vector<3x256xf32> to vector<1x256xf32>
    %99 = vector.extract_strided_slice %97 {offsets = [1, 0], sizes = [1, 256], strides = [1, 1]} : vector<3x256xf32> to vector<1x256xf32>
    %100 = vector.extract_strided_slice %97 {offsets = [2, 0], sizes = [1, 256], strides = [1, 1]} : vector<3x256xf32> to vector<1x256xf32>
    %101 = arith.maximumf %98, %99 : vector<1x256xf32>
    %102 = arith.maximumf %101, %100 : vector<1x256xf32>
    %103 = arith.subf %98, %102 : vector<1x256xf32>
    %104 = math.exp %103 : vector<1x256xf32>
    %105 = arith.subf %99, %102 : vector<1x256xf32>
    %106 = math.exp %105 : vector<1x256xf32>
    %107 = arith.subf %100, %102 : vector<1x256xf32>
    %108 = math.exp %107 : vector<1x256xf32>
    %109 = arith.addf %104, %106 : vector<1x256xf32>
    %110 = arith.addf %109, %108 : vector<1x256xf32>
    %111 = tpu.reciprocal %110 {approx = true} : vector<1x256xf32> -> vector<1x256xf32>
    %cst_56 = arith.constant 2.000000e+00 : f32
    %112 = vector.broadcast %cst_56 : f32 to vector<1x256xf32>
    %113 = arith.mulf %112, %111 : vector<1x256xf32>
    %114 = arith.mulf %104, %113 : vector<1x256xf32>
    %115 = vector.broadcast %114 : vector<1x256xf32> to vector<8x256xf32>
    %116 = arith.mulf %33, %115 : vector<8x256xf32>
    %117 = arith.mulf %106, %113 : vector<1x256xf32>
    %118 = vector.broadcast %117 : vector<1x256xf32> to vector<8x256xf32>
    %119 = arith.mulf %40, %118 : vector<8x256xf32>
    %120 = arith.addf %116, %119 : vector<8x256xf32>
    %121 = arith.mulf %108, %113 : vector<1x256xf32>
    %122 = vector.broadcast %121 : vector<1x256xf32> to vector<8x256xf32>
    %123 = arith.mulf %69, %122 : vector<8x256xf32>
    %124 = arith.addf %120, %123 : vector<8x256xf32>
    %c0_57 = arith.constant 0 : index
    %c0_58 = arith.constant 0 : index
    %c0_59 = arith.constant 0 : index
    %125 = vector.load %arg16[%c0_57, %c0_58, %c0_59] : memref<2x8x256xf32, #tpu.memory_space<vmem>>, vector<1x8x256xf32>
    %126 = vector.shape_cast %125 : vector<1x8x256xf32> to vector<8x256xf32>
    %127 = vector.shape_cast %124 : vector<8x256xf32> to vector<1x8x256xf32>
    tpu.vector_store %arg16[%c0_57, %c0_58, %c0_59], %127 {strides = array<i32>} : memref<2x8x256xf32, #tpu.memory_space<vmem>>, vector<1x8x256xf32>,
    %c1 = arith.constant 1 : index
    %c0_60 = arith.constant 0 : index
    %c0_61 = arith.constant 0 : index
    %128 = vector.load %arg1[%c1, %c0_60, %c0_61] : memref<2x4x256xbf16, #tpu.memory_space<vmem>>, vector<1x4x256xbf16>
    %129 = vector.shape_cast %128 : vector<1x4x256xbf16> to vector<4x256xbf16>
    %130 = arith.extf %129 : vector<4x256xbf16> to vector<4x256xf32>
    %c1_62 = arith.constant 1 : index
    %c0_63 = arith.constant 0 : index
    %c0_64 = arith.constant 0 : index
    %131 = vector.load %arg2[%c1_62, %c0_63, %c0_64] : memref<2x8x256xf32, #tpu.memory_space<vmem>>, vector<1x8x256xf32>
    %132 = vector.shape_cast %131 : vector<1x8x256xf32> to vector<8x256xf32>
    %c1_65 = arith.constant 1 : index
    %c0_66 = arith.constant 0 : index
    %c0_67 = arith.constant 0 : index
    %133 = vector.load %arg3[%c1_65, %c0_66, %c0_67] : memref<2x24x256xbf16, #tpu.memory_space<vmem>>, vector<1x24x256xbf16>
    %134 = vector.shape_cast %133 : vector<1x24x256xbf16> to vector<24x256xbf16>
    %135 = arith.extf %134 : vector<24x256xbf16> to vector<24x256xf32>
    %cst_68 = arith.constant dense<0.000000e+00> : vector<8x256xf32>
    %136 = tpu.matmul %7, %130, %cst_68 {dimension_numbers = #tpu.dot_dimension_numbers<[1], [0], [0], [1], [0, 0, 1, 1], [], []>} : vector<8x4xf32>, vector<4x256xf32>, vector<8x256xf32> -> vector<8x256xf32>
    %137 = vector.broadcast %8 : vector<8x1xf32> to vector<8x256xf32>
    %138 = arith.addf %136, %137 : vector<8x256xf32>
    %cst_69 = arith.constant 0.000000e+00 : f32
    %139 = vector.broadcast %cst_69 : f32 to vector<8x256xf32>
    %140 = arith.maximumf %138, %139 : vector<8x256xf32>
    %cst_70 = arith.constant 6.000000e+00 : f32
    %141 = vector.broadcast %cst_70 : f32 to vector<8x256xf32>
    %142 = arith.minimumf %140, %141 : vector<8x256xf32>
    %cst_71 = arith.constant dense<0.000000e+00> : vector<8x256xf32>
    %143 = tpu.matmul %9, %132, %cst_71 {dimension_numbers = #tpu.dot_dimension_numbers<[1], [0], [0], [1], [0, 0, 1, 1], [], []>} : vector<8x8xf32>, vector<8x256xf32>, vector<8x256xf32> -> vector<8x256xf32>
    %144 = vector.broadcast %10 : vector<8x1xf32> to vector<8x256xf32>
    %145 = arith.addf %143, %144 : vector<8x256xf32>
    %cst_72 = arith.constant 0.000000e+00 : f32
    %146 = vector.broadcast %cst_72 : f32 to vector<8x256xf32>
    %147 = arith.maximumf %145, %146 : vector<8x256xf32>
    %cst_73 = arith.constant 6.000000e+00 : f32
    %148 = vector.broadcast %cst_73 : f32 to vector<8x256xf32>
    %149 = arith.minimumf %147, %148 : vector<8x256xf32>
    %cst_74 = arith.constant dense<0.000000e+00> : vector<32x256xf32>
    %150 = tpu.matmul %11, %135, %cst_74 {dimension_numbers = #tpu.dot_dimension_numbers<[1], [0], [0], [1], [0, 0, 1, 1], [], []>} : vector<32x24xf32>, vector<24x256xf32>, vector<32x256xf32> -> vector<32x256xf32>
    %151 = vector.extract_strided_slice %150 {offsets = [0, 0], sizes = [8, 256], strides = [1, 1]} : vector<32x256xf32> to vector<8x256xf32>
    %152 = vector.extract_strided_slice %150 {offsets = [8, 0], sizes = [8, 256], strides = [1, 1]} : vector<32x256xf32> to vector<8x256xf32>
    %153 = vector.extract_strided_slice %150 {offsets = [16, 0], sizes = [8, 256], strides = [1, 1]} : vector<32x256xf32> to vector<8x256xf32>
    %154 = vector.extract_strided_slice %150 {offsets = [24, 0], sizes = [8, 256], strides = [1, 1]} : vector<32x256xf32> to vector<8x256xf32>
    %c16_i32_75 = arith.constant 16 : i32
    %155 = tpu.dynamic_rotate %152 by %c16_i32_75 dim 1 : vector<8x256xf32>, i32 -> vector<8x256xf32>
    %cst_76 = arith.constant 0.000000e+00 : f32
    %156 = vector.shape_cast %2 : vector<1x256xi1> to vector<1x256xi1>
    %157 = vector.broadcast %156 : vector<1x256xi1> to vector<8x256xi1>
    %158 = vector.broadcast %cst_76 : f32 to vector<8x256xf32>
    %159 = arith.select %157, %155, %158 : vector<8x256xi1>, vector<8x256xf32>
    %c1_i32_77 = arith.constant 1 : i32
    %160 = tpu.dynamic_rotate %153 by %c1_i32_77 dim 1 : vector<8x256xf32>, i32 -> vector<8x256xf32>
    %c17_i32_78 = arith.constant 17 : i32
    %161 = tpu.dynamic_rotate %154 by %c17_i32_78 dim 1 : vector<8x256xf32>, i32 -> vector<8x256xf32>
    %cst_79 = arith.constant 0.000000e+00 : f32
    %162 = vector.shape_cast %2 : vector<1x256xi1> to vector<1x256xi1>
    %163 = vector.broadcast %162 : vector<1x256xi1> to vector<8x256xi1>
    %164 = vector.broadcast %cst_79 : f32 to vector<8x256xf32>
    %165 = arith.select %163, %161, %164 : vector<8x256xi1>, vector<8x256xf32>
    %166 = arith.addf %160, %165 : vector<8x256xf32>
    %cst_80 = arith.constant 0.000000e+00 : f32
    %167 = vector.shape_cast %6 : vector<1x256xi1> to vector<1x256xi1>
    %168 = vector.broadcast %167 : vector<1x256xi1> to vector<8x256xi1>
    %169 = vector.broadcast %cst_80 : f32 to vector<8x256xf32>
    %170 = arith.select %168, %166, %169 : vector<8x256xi1>, vector<8x256xf32>
    %171 = arith.addf %151, %159 : vector<8x256xf32>
    %172 = arith.addf %171, %170 : vector<8x256xf32>
    %173 = vector.broadcast %12 : vector<8x1xf32> to vector<8x256xf32>
    %174 = arith.addf %172, %173 : vector<8x256xf32>
    %cst_81 = arith.constant 0.000000e+00 : f32
    %175 = vector.broadcast %cst_81 : f32 to vector<8x256xf32>
    %176 = arith.maximumf %174, %175 : vector<8x256xf32>
    %cst_82 = arith.constant 6.000000e+00 : f32
    %177 = vector.broadcast %cst_82 : f32 to vector<8x256xf32>
    %178 = arith.minimumf %176, %177 : vector<8x256xf32>
    %cst_83 = arith.constant dense<0.000000e+00> : vector<8x256xf32>
    %179 = tpu.matmul %13, %142, %cst_83 {dimension_numbers = #tpu.dot_dimension_numbers<[1], [0], [0], [1], [0, 0, 1, 1], [], []>} : vector<8x8xf32>, vector<8x256xf32>, vector<8x256xf32> -> vector<8x256xf32>
    %180 = vector.broadcast %14 : vector<8x1xf32> to vector<8x256xf32>
    %181 = arith.addf %179, %180 : vector<8x256xf32>
    %cst_84 = arith.constant 0.000000e+00 : f32
    %182 = vector.broadcast %cst_84 : f32 to vector<8x256xf32>
    %183 = arith.maximumf %181, %182 : vector<8x256xf32>
    %cst_85 = arith.constant 6.000000e+00 : f32
    %184 = vector.broadcast %cst_85 : f32 to vector<8x256xf32>
    %185 = arith.minimumf %183, %184 : vector<8x256xf32>
    %cst_86 = arith.constant dense<0.000000e+00> : vector<8x256xf32>
    %186 = tpu.matmul %13, %149, %cst_86 {dimension_numbers = #tpu.dot_dimension_numbers<[1], [0], [0], [1], [0, 0, 1, 1], [], []>} : vector<8x8xf32>, vector<8x256xf32>, vector<8x256xf32> -> vector<8x256xf32>
    %187 = vector.broadcast %14 : vector<8x1xf32> to vector<8x256xf32>
    %188 = arith.addf %186, %187 : vector<8x256xf32>
    %cst_87 = arith.constant 0.000000e+00 : f32
    %189 = vector.broadcast %cst_87 : f32 to vector<8x256xf32>
    %190 = arith.maximumf %188, %189 : vector<8x256xf32>
    %cst_88 = arith.constant 6.000000e+00 : f32
    %191 = vector.broadcast %cst_88 : f32 to vector<8x256xf32>
    %192 = arith.minimumf %190, %191 : vector<8x256xf32>
    %cst_89 = arith.constant dense<0.000000e+00> : vector<8x256xf32>
    %193 = tpu.matmul %13, %178, %cst_89 {dimension_numbers = #tpu.dot_dimension_numbers<[1], [0], [0], [1], [0, 0, 1, 1], [], []>} : vector<8x8xf32>, vector<8x256xf32>, vector<8x256xf32> -> vector<8x256xf32>
    %194 = vector.broadcast %14 : vector<8x1xf32> to vector<8x256xf32>
    %195 = arith.addf %193, %194 : vector<8x256xf32>
    %cst_90 = arith.constant 0.000000e+00 : f32
    %196 = vector.broadcast %cst_90 : f32 to vector<8x256xf32>
    %197 = arith.maximumf %195, %196 : vector<8x256xf32>
    %cst_91 = arith.constant 6.000000e+00 : f32
    %198 = vector.broadcast %cst_91 : f32 to vector<8x256xf32>
    %199 = arith.minimumf %197, %198 : vector<8x256xf32>
    %cst_92 = arith.constant dense<0.000000e+00> : vector<3x256xf32>
    %200 = tpu.matmul %15, %185, %cst_92 {dimension_numbers = #tpu.dot_dimension_numbers<[1], [0], [0], [1], [0, 0, 1, 1], [], []>} : vector<3x8xf32>, vector<8x256xf32>, vector<3x256xf32> -> vector<3x256xf32>
    %cst_93 = arith.constant dense<0.000000e+00> : vector<3x256xf32>
    %201 = tpu.matmul %16, %192, %cst_93 {dimension_numbers = #tpu.dot_dimension_numbers<[1], [0], [0], [1], [0, 0, 1, 1], [], []>} : vector<3x8xf32>, vector<8x256xf32>, vector<3x256xf32> -> vector<3x256xf32>
    %202 = arith.addf %200, %201 : vector<3x256xf32>
    %cst_94 = arith.constant dense<0.000000e+00> : vector<3x256xf32>
    %203 = tpu.matmul %17, %199, %cst_94 {dimension_numbers = #tpu.dot_dimension_numbers<[1], [0], [0], [1], [0, 0, 1, 1], [], []>} : vector<3x8xf32>, vector<8x256xf32>, vector<3x256xf32> -> vector<3x256xf32>
    %204 = arith.addf %202, %203 : vector<3x256xf32>
    %205 = vector.broadcast %18 : vector<3x1xf32> to vector<3x256xf32>
    %206 = arith.addf %204, %205 : vector<3x256xf32>
    %207 = vector.extract_strided_slice %206 {offsets = [0, 0], sizes = [1, 256], strides = [1, 1]} : vector<3x256xf32> to vector<1x256xf32>
    %208 = vector.extract_strided_slice %206 {offsets = [1, 0], sizes = [1, 256], strides = [1, 1]} : vector<3x256xf32> to vector<1x256xf32>
    %209 = vector.extract_strided_slice %206 {offsets = [2, 0], sizes = [1, 256], strides = [1, 1]} : vector<3x256xf32> to vector<1x256xf32>
    %210 = arith.maximumf %207, %208 : vector<1x256xf32>
    %211 = arith.maximumf %210, %209 : vector<1x256xf32>
    %212 = arith.subf %207, %211 : vector<1x256xf32>
    %213 = math.exp %212 : vector<1x256xf32>
    %214 = arith.subf %208, %211 : vector<1x256xf32>
    %215 = math.exp %214 : vector<1x256xf32>
    %216 = arith.subf %209, %211 : vector<1x256xf32>
    %217 = math.exp %216 : vector<1x256xf32>
    %218 = arith.addf %213, %215 : vector<1x256xf32>
    %219 = arith.addf %218, %217 : vector<1x256xf32>
    %220 = tpu.reciprocal %219 {approx = true} : vector<1x256xf32> -> vector<1x256xf32>
    %cst_95 = arith.constant 2.000000e+00 : f32
    %221 = vector.broadcast %cst_95 : f32 to vector<1x256xf32>
    %222 = arith.mulf %221, %220 : vector<1x256xf32>
    %223 = arith.mulf %213, %222 : vector<1x256xf32>
    %224 = vector.broadcast %223 : vector<1x256xf32> to vector<8x256xf32>
    %225 = arith.mulf %142, %224 : vector<8x256xf32>
    %226 = arith.mulf %215, %222 : vector<1x256xf32>
    %227 = vector.broadcast %226 : vector<1x256xf32> to vector<8x256xf32>
    %228 = arith.mulf %149, %227 : vector<8x256xf32>
    %229 = arith.addf %225, %228 : vector<8x256xf32>
    %230 = arith.mulf %217, %222 : vector<1x256xf32>
    %231 = vector.broadcast %230 : vector<1x256xf32> to vector<8x256xf32>
    %232 = arith.mulf %178, %231 : vector<8x256xf32>
    %233 = arith.addf %229, %232 : vector<8x256xf32>
    %c1_96 = arith.constant 1 : index
    %c0_97 = arith.constant 0 : index
    %c0_98 = arith.constant 0 : index
    %234 = vector.load %arg16[%c1_96, %c0_97, %c0_98] : memref<2x8x256xf32, #tpu.memory_space<vmem>>, vector<1x8x256xf32>
    %235 = vector.shape_cast %234 : vector<1x8x256xf32> to vector<8x256xf32>
    %236 = vector.shape_cast %233 : vector<8x256xf32> to vector<1x8x256xf32>
    tpu.vector_store %arg16[%c1_96, %c0_97, %c0_98], %236 {strides = array<i32>} : memref<2x8x256xf32, #tpu.memory_space<vmem>>, vector<1x8x256xf32>,
    return
  }
  func.func @transform_0(%arg0: i32) -> (i32, i32, i32) {
    %c0_i32 = arith.constant 0 : i32
    %c0_i32_0 = arith.constant 0 : i32
    %c0_i32_1 = arith.constant 0 : i32
    return %arg0, %c0_i32, %c0_i32_0 : i32, i32, i32
  }
  func.func @transform_1(%arg0: i32) -> (i32, i32, i32) {
    %c0_i32 = arith.constant 0 : i32
    %c0_i32_0 = arith.constant 0 : i32
    %c0_i32_1 = arith.constant 0 : i32
    return %arg0, %c0_i32, %c0_i32_0 : i32, i32, i32
  }
  func.func @transform_2(%arg0: i32) -> (i32, i32, i32) {
    %c0_i32 = arith.constant 0 : i32
    %c0_i32_0 = arith.constant 0 : i32
    %c0_i32_1 = arith.constant 0 : i32
    return %arg0, %c0_i32, %c0_i32_0 : i32, i32, i32
  }
  func.func @transform_3(%arg0: i32) -> (i32, i32) {
    %c0_i32 = arith.constant 0 : i32
    %c0_i32_0 = arith.constant 0 : i32
    %c0_i32_1 = arith.constant 0 : i32
    return %c0_i32, %c0_i32_0 : i32, i32
  }
  func.func @transform_4(%arg0: i32) -> (i32, i32) {
    %c0_i32 = arith.constant 0 : i32
    %c0_i32_0 = arith.constant 0 : i32
    %c0_i32_1 = arith.constant 0 : i32
    return %c0_i32, %c0_i32_0 : i32, i32
  }
  func.func @transform_5(%arg0: i32) -> (i32, i32) {
    %c0_i32 = arith.constant 0 : i32
    %c0_i32_0 = arith.constant 0 : i32
    %c0_i32_1 = arith.constant 0 : i32
    return %c0_i32, %c0_i32_0 : i32, i32
  }
  func.func @transform_6(%arg0: i32) -> (i32, i32) {
    %c0_i32 = arith.constant 0 : i32
    %c0_i32_0 = arith.constant 0 : i32
    %c0_i32_1 = arith.constant 0 : i32
    return %c0_i32, %c0_i32_0 : i32, i32
  }
  func.func @transform_7(%arg0: i32) -> (i32, i32) {
    %c0_i32 = arith.constant 0 : i32
    %c0_i32_0 = arith.constant 0 : i32
    %c0_i32_1 = arith.constant 0 : i32
    return %c0_i32, %c0_i32_0 : i32, i32
  }
  func.func @transform_8(%arg0: i32) -> (i32, i32) {
    %c0_i32 = arith.constant 0 : i32
    %c0_i32_0 = arith.constant 0 : i32
    %c0_i32_1 = arith.constant 0 : i32
    return %c0_i32, %c0_i32_0 : i32, i32
  }
  func.func @transform_9(%arg0: i32) -> (i32, i32) {
    %c0_i32 = arith.constant 0 : i32
    %c0_i32_0 = arith.constant 0 : i32
    %c0_i32_1 = arith.constant 0 : i32
    return %c0_i32, %c0_i32_0 : i32, i32
  }
  func.func @transform_10(%arg0: i32) -> (i32, i32) {
    %c0_i32 = arith.constant 0 : i32
    %c0_i32_0 = arith.constant 0 : i32
    %c0_i32_1 = arith.constant 0 : i32
    return %c0_i32, %c0_i32_0 : i32, i32
  }
  func.func @transform_11(%arg0: i32) -> (i32, i32) {
    %c0_i32 = arith.constant 0 : i32
    %c0_i32_0 = arith.constant 0 : i32
    %c0_i32_1 = arith.constant 0 : i32
    return %c0_i32, %c0_i32_0 : i32, i32
  }
  func.func @transform_12(%arg0: i32) -> (i32, i32) {
    %c0_i32 = arith.constant 0 : i32
    %c0_i32_0 = arith.constant 0 : i32
    %c0_i32_1 = arith.constant 0 : i32
    return %c0_i32, %c0_i32_0 : i32, i32
  }
  func.func @transform_13(%arg0: i32) -> (i32, i32) {
    %c0_i32 = arith.constant 0 : i32
    %c0_i32_0 = arith.constant 0 : i32
    %c0_i32_1 = arith.constant 0 : i32
    return %c0_i32, %c0_i32_0 : i32, i32
  }
  func.func @transform_14(%arg0: i32) -> (i32, i32) {
    %c0_i32 = arith.constant 0 : i32
    %c0_i32_0 = arith.constant 0 : i32
    %c0_i32_1 = arith.constant 0 : i32
    return %c0_i32, %c0_i32_0 : i32, i32
  }
  func.func @transform_15(%arg0: i32) -> (i32, i32, i32) {
    %c0_i32 = arith.constant 0 : i32
    %c0_i32_0 = arith.constant 0 : i32
    %c0_i32_1 = arith.constant 0 : i32
    return %arg0, %c0_i32, %c0_i32_0 : i32, i32, i32
  }
}

</mosaic_0001>

<llo_original>
// kernel: mobilenet_fuse.1
$region0: #{mobilenet_fuse.1}
  #allocation0 [shape = 'u32[]', space=smem, size = 0x4, offset = 0x4, fixed_abs, tag = 'smem constant byte address 0x4 - core index']
  #allocation1 [shape = 'u32[144,128]{1,0:T(1,128)}', space=vmem, size = 0x12000, scoped, tag = 'internal scratch']
  %s0 = inlined_call_operand.vmem [shape: bf16[2,4,256], index: 0, kind: input, shape index: {}]
  %s1 = inlined_call_operand.vmem [shape: f32[2,8,256], index: 1, kind: input, shape index: {}]
  %s2 = inlined_call_operand.vmem [shape: bf16[2,24,256], index: 2, kind: input, shape index: {}]
  %s3 = inlined_call_operand.vmem [shape: f32[8,4], index: 3, kind: input, shape index: {}]
  %s4 = inlined_call_operand.vmem [shape: f32[8,1], index: 4, kind: input, shape index: {}]
  %s5 = inlined_call_operand.vmem [shape: f32[8,8], index: 5, kind: input, shape index: {}]
  %s6 = inlined_call_operand.vmem [shape: f32[8,1], index: 6, kind: input, shape index: {}]
  %s7 = inlined_call_operand.vmem [shape: f32[32,24], index: 7, kind: input, shape index: {}]
  %s8 = inlined_call_operand.vmem [shape: f32[8,1], index: 8, kind: input, shape index: {}]
  %s9 = inlined_call_operand.vmem [shape: f32[8,8], index: 9, kind: input, shape index: {}]
  %s10 = inlined_call_operand.vmem [shape: f32[8,1], index: 10, kind: input, shape index: {}]
  %s11 = inlined_call_operand.vmem [shape: f32[3,8], index: 11, kind: input, shape index: {}]
  %s12 = inlined_call_operand.vmem [shape: f32[3,8], index: 12, kind: input, shape index: {}]
  %s13 = inlined_call_operand.vmem [shape: f32[3,8], index: 13, kind: input, shape index: {}]
  %s14 = inlined_call_operand.vmem [shape: f32[3,1], index: 14, kind: input, shape index: {}]
  %s15 = inlined_call_operand.vmem [shape: f32[2,8,256], index: 15, kind: output, shape index: {}]
  %s16 = sld [smem:[#allocation0]]
  $region70: #{mobilenet_fuse.1} parent=0
    _
  %s18 = ssub.s32 1, %s16
  %s19 = scalar_select 0, %s18, %s16
  // Predicated region
  $region2: #{mobilenet_fuse.1} parent=0 // pred_check
    _
  $region3: #{mobilenet_fuse.1} parent=0 // pred_check_branch
    %21 = sbr.rel (0) target = $region5
  $region4: #{mobilenet_fuse.1} parent=0 // pred_region
    _
  $region5: #{mobilenet_fuse.1} parent=0 // pred_fallthru
    _
  // Predicated region
  $region6: #{mobilenet_fuse.1} parent=0 // pred_check
    _
  $region7: #{mobilenet_fuse.1} parent=0 // pred_check_branch
    %23 = sbr.rel (0) target = $region9
  $region8: #{mobilenet_fuse.1} parent=0 // pred_region
    _
  $region9: #{mobilenet_fuse.1} parent=0 // pred_fallthru
    _
  // Predicated region
  $region10: #{mobilenet_fuse.1} parent=0 // pred_check
    _
  $region11: #{mobilenet_fuse.1} parent=0 // pred_check_branch
    %25 = sbr.rel (0) target = $region13
  $region12: #{mobilenet_fuse.1} parent=0 // pred_region
    _
  $region13: #{mobilenet_fuse.1} parent=0 // pred_fallthru
    _
  // Predicated region
  $region14: #{mobilenet_fuse.1} parent=0 // pred_check
    _
  $region15: #{mobilenet_fuse.1} parent=0 // pred_check_branch
    %27 = sbr.rel (0) target = $region17
  $region16: #{mobilenet_fuse.1} parent=0 // pred_region
    _
  $region17: #{mobilenet_fuse.1} parent=0 // pred_fallthru
    _
  // Predicated region
  $region18: #{mobilenet_fuse.1} parent=0 // pred_check
    _
  $region19: #{mobilenet_fuse.1} parent=0 // pred_check_branch
    %29 = sbr.rel (0) target = $region21
  $region20: #{mobilenet_fuse.1} parent=0 // pred_region
    _
  $region21: #{mobilenet_fuse.1} parent=0 // pred_fallthru
    _
  // Predicated region
  $region22: #{mobilenet_fuse.1} parent=0 // pred_check
    _
  $region23: #{mobilenet_fuse.1} parent=0 // pred_check_branch
    %31 = sbr.rel (0) target = $region25
  $region24: #{mobilenet_fuse.1} parent=0 // pred_region
    _
  $region25: #{mobilenet_fuse.1} parent=0 // pred_fallthru
    _
  // Predicated region
  $region26: #{mobilenet_fuse.1} parent=0 // pred_check
    _
  $region27: #{mobilenet_fuse.1} parent=0 // pred_check_branch
    %33 = sbr.rel (0) target = $region29
  $region28: #{mobilenet_fuse.1} parent=0 // pred_region
    _
  $region29: #{mobilenet_fuse.1} parent=0 // pred_fallthru
    _
  // Predicated region
  $region30: #{mobilenet_fuse.1} parent=0 // pred_check
    _
  $region31: #{mobilenet_fuse.1} parent=0 // pred_check_branch
    %35 = sbr.rel (0) target = $region33
  $region32: #{mobilenet_fuse.1} parent=0 // pred_region
    _
  $region33: #{mobilenet_fuse.1} parent=0 // pred_fallthru
    _
  // Predicated region
  $region34: #{mobilenet_fuse.1} parent=0 // pred_check
    _
  $region35: #{mobilenet_fuse.1} parent=0 // pred_check_branch
    %37 = sbr.rel (0) target = $region37
  $region36: #{mobilenet_fuse.1} parent=0 // pred_region
    _
  $region37: #{mobilenet_fuse.1} parent=0 // pred_fallthru
    _
  // Predicated region
  $region38: #{mobilenet_fuse.1} parent=0 // pred_check
    _
  $region39: #{mobilenet_fuse.1} parent=0 // pred_check_branch
    %39 = sbr.rel (0) target = $region41
  $region40: #{mobilenet_fuse.1} parent=0 // pred_region
    _
  $region41: #{mobilenet_fuse.1} parent=0 // pred_fallthru
    _
  // Predicated region
  $region42: #{mobilenet_fuse.1} parent=0 // pred_check
    _
  $region43: #{mobilenet_fuse.1} parent=0 // pred_check_branch
    %41 = sbr.rel (0) target = $region45
  $region44: #{mobilenet_fuse.1} parent=0 // pred_region
    _
  $region45: #{mobilenet_fuse.1} parent=0 // pred_fallthru
    _
  // Predicated region
  $region46: #{mobilenet_fuse.1} parent=0 // pred_check
    _
  $region47: #{mobilenet_fuse.1} parent=0 // pred_check_branch
    %43 = sbr.rel (0) target = $region49
  $region48: #{mobilenet_fuse.1} parent=0 // pred_region
    _
  $region49: #{mobilenet_fuse.1} parent=0 // pred_fallthru
    _
  // Predicated region
  $region50: #{mobilenet_fuse.1} parent=0 // pred_check
    _
  $region51: #{mobilenet_fuse.1} parent=0 // pred_check_branch
    %45 = sbr.rel (0) target = $region53
  $region52: #{mobilenet_fuse.1} parent=0 // pred_region
    _
  $region53: #{mobilenet_fuse.1} parent=0 // pred_fallthru
    _
  // Predicated region
  $region54: #{mobilenet_fuse.1} parent=0 // pred_check
    _
  $region55: #{mobilenet_fuse.1} parent=0 // pred_check_branch
    %47 = sbr.rel (0) target = $region57
  $region56: #{mobilenet_fuse.1} parent=0 // pred_region
    _
  $region57: #{mobilenet_fuse.1} parent=0 // pred_fallthru
    _
  // Predicated region
  $region58: #{mobilenet_fuse.1} parent=0 // pred_check
    _
  $region59: #{mobilenet_fuse.1} parent=0 // pred_check_branch
    %49 = sbr.rel (0) target = $region61
  $region60: #{mobilenet_fuse.1} parent=0 // pred_region
    _
  $region61: #{mobilenet_fuse.1} parent=0 // pred_fallthru
    _
  %v50 = vlaneseq
  %v51 = vand.u32 %v50, 127
  %v52 = vadd.s32 %v51, 128
  %vm53 = vcmp.ge.s32.totalorder %v51, 16
  %vm54 = vcmp.ge.s32.totalorder %v52, 16
  %v55 = vand.u32 %v51, 15
  %v56 = vand.u32 %v52, 15
  %vm57 = vcmp.ne.s32.totalorder %v55, 0
  %vm58 = vcmp.ne.s32.totalorder %v56, 0
  %v59 = vld [vmem:[%s3] sm:$0xff]
  %v60 = vld [vmem:[%s4] sm:$0xff]
  %v61 = vld [vmem:[%s5] sm:$0xff]
  %v62 = vld [vmem:[%s6] sm:$0xff]
  %v63 = vld [vmem:[%s7] sm:$0xff]
  %v64 = vld [vmem:[%s7 + $0x8] sm:$0xff]
  %v65 = vld [vmem:[%s7 + $0x10] sm:$0xff]
  %v66 = vld [vmem:[%s7 + $0x18] sm:$0xff]
  %v67 = vld [vmem:[%s8] sm:$0xff]
  %v68 = vld [vmem:[%s9] sm:$0xff]
  %v69 = vld [vmem:[%s10] sm:$0xff]
  %v70 = vld [vmem:[%s11] sm:$0x7]
  %v71 = vld [vmem:[%s12] sm:$0x7]
  %v72 = vld [vmem:[%s13] sm:$0x7]
  %v73 = vld [vmem:[%s14] sm:$0x7]
  %v74 = vld [vmem:[%s0] sm:$0xf]
  %v75 = vunpack.c.l.bf16 %v74
  %v76 = vld [vmem:[%s1] sm:$0xff]
  %v77 = vld [vmem:[%s1 + $0x8] sm:$0xff]
  %v78 = vld [vmem:[%s2] sm:$0xff]
  %v79 = vld [vmem:[%s2 + $0x8] sm:$0xff]
  %v80 = vld [vmem:[%s2 + $0x10] sm:$0xff]
  %v81 = vunpack.c.l.bf16 %v78
  %v82 = vunpack.c.h.bf16 %v78
  %v83 = vunpack.c.l.bf16 %v79
  %v84 = vunpack.c.h.bf16 %v79
  %v85 = vunpack.c.l.bf16 %v80
  %v86 = vunpack.c.h.bf16 %v80
  %88 = vset.pattern.permute.xlu0 0
  %89 = vperm.xlu0 %88, %v60
  %v90 = vpop.permute.xlu0 %89
  %v93 = vcombine.high %v75, %v75
  %vm94 = vcmask 31744
  %v96 = vsel %vm94, %v59, 0
  %vm98 = vcmask 1043456
  %v99 = vsel %vm98, %v75, 0
  %v101 = vsel %vm98, %v93, 0
  %103 = vmatprep.subr.mxu0 %v101
  %104 = vmatpush1.msra.mxu0 %v99
  %105 = vmatprep.subr.mxu0 0.0
  %106 = vmatpush1.msra.mxu0 0.0
  %107 = vmatprep.subr.mxu0 0.0
  %108 = vmatpush1.msra.mxu0 0.0
  %109 = vmatprep.subr.mxu0 0.0
  %110 = vmatpush1.msra.mxu0 0.0
  %111 = vmatprep.subr.mxu0 0.0
  %112 = vmatpush1.msra.mxu0 0.0
  %113 = vmatprep.subr.mxu0 0.0
  %114 = vmatpush1.msra.mxu0 0.0
  %115 = vmatprep.subr.mxu0 0.0
  %116 = vmatpush1.msra.mxu0 0.0
  %117 = vmatprep.subr.mxu0 0.0
  %118 = vmatpush1.msra.mxu0 0.0
  %119 = vmatprep.subr.mxu0 0.0
  %120 = vmatpush1.msra.mxu0 0.0
  %121 = vmatprep.subr.mxu0 0.0
  %122 = vmatpush1.msra.mxu0 0.0
  %123 = vmatprep.subr.mxu0 0.0
  %124 = vmatpush1.msra.mxu0 0.0
  %125 = vmatprep.subr.mxu0 0.0
  %126 = vmatpush1.msra.mxu0 0.0
  %127 = vmatprep.subr.mxu0 0.0
  %128 = vmatpush1.msra.mxu0 0.0
  %129 = vmatprep.subr.mxu0 0.0
  %130 = vmatpush1.msra.mxu0 0.0
  %131 = vmatprep.subr.mxu0 0.0
  %132 = vmatpush1.msra.mxu0 0.0
  %133 = vmatprep.subr.mxu0 0.0
  %134 = vmatpush1.msra.mxu0 0.0
  %135 = vmatprep.subr.mxu0 0.0
  %136 = vmatpush1.msra.mxu0 0.0
  %137 = vmatprep.subr.mxu0 0.0
  %138 = vmatpush1.msra.mxu0 0.0
  %139 = vmatprep.subr.mxu0 0.0
  %140 = vmatpush1.msra.mxu0 0.0
  %141 = vmatprep.subr.mxu0 0.0
  %142 = vmatpush1.msra.mxu0 0.0
  %143 = vmatprep.subr.mxu0 0.0
  %144 = vmatpush1.msra.mxu0 0.0
  %145 = vmatprep.subr.mxu0 0.0
  %146 = vmatpush1.msra.mxu0 0.0
  %147 = vmatprep.subr.mxu0 0.0
  %148 = vmatpush1.msra.mxu0 0.0
  %149 = vmatprep.subr.mxu0 0.0
  %150 = vmatpush1.msra.mxu0 0.0
  %151 = vmatprep.subr.mxu0 0.0
  %152 = vmatpush1.msra.mxu0 0.0
  %153 = vmatprep.subr.mxu0 0.0
  %154 = vmatpush1.msra.mxu0 0.0
  %155 = vmatprep.subr.mxu0 0.0
  %156 = vmatpush1.msra.mxu0 0.0
  %157 = vmatprep.subr.mxu0 0.0
  %158 = vmatpush1.msra.mxu0 0.0
  %159 = vmatprep.subr.mxu0 0.0
  %160 = vmatpush1.msra.mxu0 0.0
  %161 = vmatprep.subr.mxu0 0.0
  %162 = vmatpush1.msra.mxu0 0.0
  %163 = vmatprep.subr.mxu0 0.0
  %164 = vmatpush1.msra.mxu0 0.0
  %165 = vmatprep.subr.mxu0 0.0
  %166 = vmatpush1.msra.mxu0 0.0
  %167 = vmatprep.mubr.f32.mxu0 0.0
  %168 = vmatmul.mubr.f32.gmra.mrb[0].mxu0 %v96
  %v169 = vpop.f32.mrb[0].mxu0
  %v170 = vadd.f32 %v90, %v169
  %v171 = vpop.f32.mrb[0].mxu0
  %v172 = vadd.f32 %v90, %v171
  %173 = vdwg.mxu0
  %v174 = vmax.f32 %v170, 0.0
  %v175 = vmax.f32 %v172, 0.0
  %v176 = vmin.f32 %v174, 6.0
  %v177 = vmin.f32 %v175, 6.0
  %179 = vset.pattern.permute.xlu0 0
  %180 = vperm.xlu0 %179, %v62
  %v181 = vpop.permute.xlu0 %180
  %vm183 = vcmask 64512
  %v185 = vsel %vm183, %v61, 0
  %187 = vmatprep.subr.mxu0 %v77
  %188 = vmatpush1.msra.mxu0 %v76
  %189 = vmatprep.subr.mxu0 0.0
  %190 = vmatpush1.msra.mxu0 0.0
  %191 = vmatprep.subr.mxu0 0.0
  %192 = vmatpush1.msra.mxu0 0.0
  %193 = vmatprep.subr.mxu0 0.0
  %194 = vmatpush1.msra.mxu0 0.0
  %195 = vmatprep.subr.mxu0 0.0
  %196 = vmatpush1.msra.mxu0 0.0
  %197 = vmatprep.subr.mxu0 0.0
  %198 = vmatpush1.msra.mxu0 0.0
  %199 = vmatprep.subr.mxu0 0.0
  %200 = vmatpush1.msra.mxu0 0.0
  %201 = vmatprep.subr.mxu0 0.0
  %202 = vmatpush1.msra.mxu0 0.0
  %203 = vmatprep.subr.mxu0 0.0
  %204 = vmatpush1.msra.mxu0 0.0
  %205 = vmatprep.subr.mxu0 0.0
  %206 = vmatpush1.msra.mxu0 0.0
  %207 = vmatprep.subr.mxu0 0.0
  %208 = vmatpush1.msra.mxu0 0.0
  %209 = vmatprep.subr.mxu0 0.0
  %210 = vmatpush1.msra.mxu0 0.0
  %211 = vmatprep.subr.mxu0 0.0
  %212 = vmatpush1.msra.mxu0 0.0
  %213 = vmatprep.subr.mxu0 0.0
  %214 = vmatpush1.msra.mxu0 0.0
  %215 = vmatprep.subr.mxu0 0.0
  %216 = vmatpush1.msra.mxu0 0.0
  %217 = vmatprep.subr.mxu0 0.0
  %218 = vmatpush1.msra.mxu0 0.0
  %219 = vmatprep.subr.mxu0 0.0
  %220 = vmatpush1.msra.mxu0 0.0
  %221 = vmatprep.subr.mxu0 0.0
  %222 = vmatpush1.msra.mxu0 0.0
  %223 = vmatprep.subr.mxu0 0.0
  %224 = vmatpush1.msra.mxu0 0.0
  %225 = vmatprep.subr.mxu0 0.0
  %226 = vmatpush1.msra.mxu0 0.0
  %227 = vmatprep.subr.mxu0 0.0
  %228 = vmatpush1.msra.mxu0 0.0
  %229 = vmatprep.subr.mxu0 0.0
  %230 = vmatpush1.msra.mxu0 0.0
  %231 = vmatprep.subr.mxu0 0.0
  %232 = vmatpush1.msra.mxu0 0.0
  %233 = vmatprep.subr.mxu0 0.0
  %234 = vmatpush1.msra.mxu0 0.0
  %235 = vmatprep.subr.mxu0 0.0
  %236 = vmatpush1.msra.mxu0 0.0
  %237 = vmatprep.subr.mxu0 0.0
  %238 = vmatpush1.msra.mxu0 0.0
  %239 = vmatprep.subr.mxu0 0.0
  %240 = vmatpush1.msra.mxu0 0.0
  %241 = vmatprep.subr.mxu0 0.0
  %242 = vmatpush1.msra.mxu0 0.0
  %243 = vmatprep.subr.mxu0 0.0
  %244 = vmatpush1.msra.mxu0 0.0
  %245 = vmatprep.subr.mxu0 0.0
  %246 = vmatpush1.msra.mxu0 0.0
  %247 = vmatprep.subr.mxu0 0.0
  %248 = vmatpush1.msra.mxu0 0.0
  %249 = vmatprep.subr.mxu0 0.0
  %250 = vmatpush1.msra.mxu0 0.0
  %251 = vmatprep.mubr.f32.mxu0 0.0
  %252 = vmatmul.mubr.f32.gmra.mrb[0].mxu0 %v185
  %v253 = vpop.f32.mrb[0].mxu0
  %v254 = vadd.f32 %v181, %v253
  %v255 = vpop.f32.mrb[0].mxu0
  %v256 = vadd.f32 %v181, %v255
  %257 = vdwg.mxu0
  %v258 = vmax.f32 %v254, 0.0
  %v259 = vmax.f32 %v256, 0.0
  %v260 = vmin.f32 %v258, 6.0
  %v261 = vmin.f32 %v259, 6.0
  %vm262 = vcmask 195584
  %v264 = vsel %vm262, %v63, 0
  %v267 = vsel %vm262, %v64, 0
  %v270 = vsel %vm262, %v65, 0
  %v273 = vsel %vm262, %v66, 0
  %275 = vmatprep.subr.mxu0 %v82
  %276 = vmatpush1.msra.mxu0 %v81
  %277 = vmatprep.subr.mxu0 %v84
  %278 = vmatpush1.msra.mxu0 %v83
  %279 = vmatprep.subr.mxu0 %v86
  %280 = vmatpush1.msra.mxu0 %v85
  %281 = vmatprep.subr.mxu0 0.0
  %282 = vmatpush1.msra.mxu0 0.0
  %283 = vmatprep.subr.mxu0 0.0
  %284 = vmatpush1.msra.mxu0 0.0
  %285 = vmatprep.subr.mxu0 0.0
  %286 = vmatpush1.msra.mxu0 0.0
  %287 = vmatprep.subr.mxu0 0.0
  %288 = vmatpush1.msra.mxu0 0.0
  %289 = vmatprep.subr.mxu0 0.0
  %290 = vmatpush1.msra.mxu0 0.0
  %291 = vmatprep.subr.mxu0 0.0
  %292 = vmatpush1.msra.mxu0 0.0
  %293 = vmatprep.subr.mxu0 0.0
  %294 = vmatpush1.msra.mxu0 0.0
  %295 = vmatprep.subr.mxu0 0.0
  %296 = vmatpush1.msra.mxu0 0.0
  %297 = vmatprep.subr.mxu0 0.0
  %298 = vmatpush1.msra.mxu0 0.0
  %299 = vmatprep.subr.mxu0 0.0
  %300 = vmatpush1.msra.mxu0 0.0
  %301 = vmatprep.subr.mxu0 0.0
  %302 = vmatpush1.msra.mxu0 0.0
  %303 = vmatprep.subr.mxu0 0.0
  %304 = vmatpush1.msra.mxu0 0.0
  %305 = vmatprep.subr.mxu0 0.0
  %306 = vmatpush1.msra.mxu0 0.0
  %307 = vmatprep.subr.mxu0 0.0
  %308 = vmatpush1.msra.mxu0 0.0
  %309 = vmatprep.subr.mxu0 0.0
  %310 = vmatpush1.msra.mxu0 0.0
  %311 = vmatprep.subr.mxu0 0.0
  %312 = vmatpush1.msra.mxu0 0.0
  %313 = vmatprep.subr.mxu0 0.0
  %314 = vmatpush1.msra.mxu0 0.0
  %315 = vmatprep.subr.mxu0 0.0
  %316 = vmatpush1.msra.mxu0 0.0
  %317 = vmatprep.subr.mxu0 0.0
  %318 = vmatpush1.msra.mxu0 0.0
  %319 = vmatprep.subr.mxu0 0.0
  %320 = vmatpush1.msra.mxu0 0.0
  %321 = vmatprep.subr.mxu0 0.0
  %322 = vmatpush1.msra.mxu0 0.0
  %323 = vmatprep.subr.mxu0 0.0
  %324 = vmatpush1.msra.mxu0 0.0
  %325 = vmatprep.subr.mxu0 0.0
  %326 = vmatpush1.msra.mxu0 0.0
  %327 = vmatprep.subr.mxu0 0.0
  %328 = vmatpush1.msra.mxu0 0.0
  %329 = vmatprep.subr.mxu0 0.0
  %330 = vmatpush1.msra.mxu0 0.0
  %331 = vmatprep.subr.mxu0 0.0
  %332 = vmatpush1.msra.mxu0 0.0
  %333 = vmatprep.subr.mxu0 0.0
  %334 = vmatpush1.msra.mxu0 0.0
  %335 = vmatprep.subr.mxu0 0.0
  %336 = vmatpush1.msra.mxu0 0.0
  %337 = vmatprep.subr.mxu0 0.0
  %338 = vmatpush1.msra.mxu0 0.0
  %339 = vmatprep.mubr.f32.mxu0 0.0
  %340 = vmatmul.mubr.f32.gmra.mrb[0].mxu0 %v264
  %v341 = vpop.f32.mrb[0].mxu0
  %v342 = vadd.f32 0.0, %v341
  %v343 = vpop.f32.mrb[0].mxu0
  %v344 = vadd.f32 0.0, %v343
  %345 = vmatprep.mubr.f32.mxu0 0.0
  %346 = vmatmul.mubr.f32.gmra.mrb[0].mxu0 %v267
  %v347 = vpop.f32.mrb[0].mxu0
  %v348 = vadd.f32 0.0, %v347
  %v349 = vpop.f32.mrb[0].mxu0
  %v350 = vadd.f32 0.0, %v349
  %351 = vmatprep.mubr.f32.mxu0 0.0
  %352 = vmatmul.mubr.f32.gmra.mrb[0].mxu0 %v270
  %v353 = vpop.f32.mrb[0].mxu0
  %v354 = vadd.f32 0.0, %v353
  %v355 = vpop.f32.mrb[0].mxu0
  %v356 = vadd.f32 0.0, %v355
  %357 = vmatprep.mubr.f32.mxu0 0.0
  %358 = vmatmul.mubr.f32.gmra.mrb[0].mxu0 %v273
  %v359 = vpop.f32.mrb[0].mxu0
  %v360 = vadd.f32 0.0, %v359
  %v361 = vpop.f32.mrb[0].mxu0
  %v362 = vadd.f32 0.0, %v361
  %363 = vdwg.mxu0
  %364 = vrot.lane.b32.xlu0 %v348, 16
  %v365 = vpop.permute.xlu0 %364
  %366 = vrot.lane.b32.xlu0 %v350, 16
  %v367 = vpop.permute.xlu0 %366
  %vm368 = vcmp.lt.s32.totalorder %v51, 16
  %v369 = vsel %vm368, %v365, %v367
  %v370 = vsel %vm368, %v367, %v365
  %v371 = vsel %vm53, 1, 0
  %v372 = vsel %vm54, 1, 0
  %vm373 = vcmp.eq.s32.totalorder %v371, 1
  %vm374 = vcmp.eq.s32.totalorder %v372, 1
  %v375 = vsel %vm373, %v370, 0.0
  %v376 = vsel %vm374, %v369, 0.0
  %377 = vrot.lane.b32.xlu0 %v354, 1
  %v378 = vpop.permute.xlu0 %377
  %379 = vrot.lane.b32.xlu0 %v356, 1
  %v380 = vpop.permute.xlu0 %379
  %vm381 = vcmp.lt.s32.totalorder %v51, 1
  %v382 = vsel %vm381, %v378, %v380
  %v383 = vsel %vm381, %v380, %v378
  %384 = vrot.lane.b32.xlu0 %v360, 17
  %v385 = vpop.permute.xlu0 %384
  %386 = vrot.lane.b32.xlu0 %v362, 17
  %v387 = vpop.permute.xlu0 %386
  %vm388 = vcmp.lt.s32.totalorder %v51, 17
  %v389 = vsel %vm388, %v385, %v387
  %v390 = vsel %vm388, %v387, %v385
  %v391 = vsel %vm373, %v390, 0.0
  %v392 = vsel %vm374, %v389, 0.0
  %v393 = vadd.f32 %v383, %v391
  %v394 = vadd.f32 %v382, %v392
  %v395 = vsel %vm57, 1, 0
  %v396 = vsel %vm58, 1, 0
  %vm397 = vcmp.eq.s32.totalorder %v395, 1
  %vm398 = vcmp.eq.s32.totalorder %v396, 1
  %v399 = vsel %vm397, %v393, 0.0
  %v400 = vsel %vm398, %v394, 0.0
  %v401 = vadd.f32 %v342, %v375
  %v402 = vadd.f32 %v344, %v376
  %v403 = vadd.f32 %v401, %v399
  %v404 = vadd.f32 %v402, %v400
  %406 = vset.pattern.permute.xlu0 0
  %407 = vperm.xlu0 %406, %v67
  %v408 = vpop.permute.xlu0 %407
  %v410 = vadd.f32 %v403, %v408
  %v411 = vadd.f32 %v404, %v408
  %v412 = vmax.f32 %v410, 0.0
  %v413 = vmax.f32 %v411, 0.0
  %v414 = vmin.f32 %v412, 6.0
  %v415 = vmin.f32 %v413, 6.0
  %417 = vset.pattern.permute.xlu0 0
  %418 = vperm.xlu0 %417, %v69
  %v419 = vpop.permute.xlu0 %418
  %v422 = vsel %vm183, %v68, 0
  %424 = vmatprep.subr.mxu0 %v177
  %425 = vmatpush1.msra.mxu0 %v176
  %426 = vmatprep.subr.mxu0 0.0
  %427 = vmatpush1.msra.mxu0 0.0
  %428 = vmatprep.subr.mxu0 0.0
  %429 = vmatpush1.msra.mxu0 0.0
  %430 = vmatprep.subr.mxu0 0.0
  %431 = vmatpush1.msra.mxu0 0.0
  %432 = vmatprep.subr.mxu0 0.0
  %433 = vmatpush1.msra.mxu0 0.0
  %434 = vmatprep.subr.mxu0 0.0
  %435 = vmatpush1.msra.mxu0 0.0
  %436 = vmatprep.subr.mxu0 0.0
  %437 = vmatpush1.msra.mxu0 0.0
  %438 = vmatprep.subr.mxu0 0.0
  %439 = vmatpush1.msra.mxu0 0.0
  %440 = vmatprep.subr.mxu0 0.0
  %441 = vmatpush1.msra.mxu0 0.0
  %442 = vmatprep.subr.mxu0 0.0
  %443 = vmatpush1.msra.mxu0 0.0
  %444 = vmatprep.subr.mxu0 0.0
  %445 = vmatpush1.msra.mxu0 0.0
  %446 = vmatprep.subr.mxu0 0.0
  %447 = vmatpush1.msra.mxu0 0.0
  %448 = vmatprep.subr.mxu0 0.0
  %449 = vmatpush1.msra.mxu0 0.0
  %450 = vmatprep.subr.mxu0 0.0
  %451 = vmatpush1.msra.mxu0 0.0
  %452 = vmatprep.subr.mxu0 0.0
  %453 = vmatpush1.msra.mxu0 0.0
  %454 = vmatprep.subr.mxu0 0.0
  %455 = vmatpush1.msra.mxu0 0.0
  %456 = vmatprep.subr.mxu0 0.0
  %457 = vmatpush1.msra.mxu0 0.0
  %458 = vmatprep.subr.mxu0 0.0
  %459 = vmatpush1.msra.mxu0 0.0
  %460 = vmatprep.subr.mxu0 0.0
  %461 = vmatpush1.msra.mxu0 0.0
  %462 = vmatprep.subr.mxu0 0.0
  %463 = vmatpush1.msra.mxu0 0.0
  %464 = vmatprep.subr.mxu0 0.0
  %465 = vmatpush1.msra.mxu0 0.0
  %466 = vmatprep.subr.mxu0 0.0
  %467 = vmatpush1.msra.mxu0 0.0
  %468 = vmatprep.subr.mxu0 0.0
  %469 = vmatpush1.msra.mxu0 0.0
  %470 = vmatprep.subr.mxu0 0.0
  %471 = vmatpush1.msra.mxu0 0.0
  %472 = vmatprep.subr.mxu0 0.0
  %473 = vmatpush1.msra.mxu0 0.0
  %474 = vmatprep.subr.mxu0 0.0
  %475 = vmatpush1.msra.mxu0 0.0
  %476 = vmatprep.subr.mxu0 0.0
  %477 = vmatpush1.msra.mxu0 0.0
  %478 = vmatprep.subr.mxu0 0.0
  %479 = vmatpush1.msra.mxu0 0.0
  %480 = vmatprep.subr.mxu0 0.0
  %481 = vmatpush1.msra.mxu0 0.0
  %482 = vmatprep.subr.mxu0 0.0
  %483 = vmatpush1.msra.mxu0 0.0
  %484 = vmatprep.subr.mxu0 0.0
  %485 = vmatpush1.msra.mxu0 0.0
  %486 = vmatprep.subr.mxu0 0.0
  %487 = vmatpush1.msra.mxu0 0.0
  %488 = vmatprep.mubr.f32.mxu0 0.0
  %489 = vmatmul.mubr.f32.gmra.mrb[0].mxu0 %v422
  %v490 = vpop.f32.mrb[0].mxu0
  %v491 = vadd.f32 %v419, %v490
  %v492 = vpop.f32.mrb[0].mxu0
  %v493 = vadd.f32 %v419, %v492
  %494 = vdwg.mxu0
  %v495 = vmax.f32 %v491, 0.0
  %v496 = vmax.f32 %v493, 0.0
  %v497 = vmin.f32 %v495, 6.0
  %v498 = vmin.f32 %v496, 6.0
  %499 = vmatprep.subr.mxu0 %v261
  %500 = vmatpush1.msra.mxu0 %v260
  %501 = vmatprep.subr.mxu0 0.0
  %502 = vmatpush1.msra.mxu0 0.0
  %503 = vmatprep.subr.mxu0 0.0
  %504 = vmatpush1.msra.mxu0 0.0
  %505 = vmatprep.subr.mxu0 0.0
  %506 = vmatpush1.msra.mxu0 0.0
  %507 = vmatprep.subr.mxu0 0.0
  %508 = vmatpush1.msra.mxu0 0.0
  %509 = vmatprep.subr.mxu0 0.0
  %510 = vmatpush1.msra.mxu0 0.0
  %511 = vmatprep.subr.mxu0 0.0
  %512 = vmatpush1.msra.mxu0 0.0
  %513 = vmatprep.subr.mxu0 0.0
  %514 = vmatpush1.msra.mxu0 0.0
  %515 = vmatprep.subr.mxu0 0.0
  %516 = vmatpush1.msra.mxu0 0.0
  %517 = vmatprep.subr.mxu0 0.0
  %518 = vmatpush1.msra.mxu0 0.0
  %519 = vmatprep.subr.mxu0 0.0
  %520 = vmatpush1.msra.mxu0 0.0
  %521 = vmatprep.subr.mxu0 0.0
  %522 = vmatpush1.msra.mxu0 0.0
  %523 = vmatprep.subr.mxu0 0.0
  %524 = vmatpush1.msra.mxu0 0.0
  %525 = vmatprep.subr.mxu0 0.0
  %526 = vmatpush1.msra.mxu0 0.0
  %527 = vmatprep.subr.mxu0 0.0
  %528 = vmatpush1.msra.mxu0 0.0
  %529 = vmatprep.subr.mxu0 0.0
  %530 = vmatpush1.msra.mxu0 0.0
  %531 = vmatprep.subr.mxu0 0.0
  %532 = vmatpush1.msra.mxu0 0.0
  %533 = vmatprep.subr.mxu0 0.0
  %534 = vmatpush1.msra.mxu0 0.0
  %535 = vmatprep.subr.mxu0 0.0
  %536 = vmatpush1.msra.mxu0 0.0
  %537 = vmatprep.subr.mxu0 0.0
  %538 = vmatpush1.msra.mxu0 0.0
  %539 = vmatprep.subr.mxu0 0.0
  %540 = vmatpush1.msra.mxu0 0.0
  %541 = vmatprep.subr.mxu0 0.0
  %542 = vmatpush1.msra.mxu0 0.0
  %543 = vmatprep.subr.mxu0 0.0
  %544 = vmatpush1.msra.mxu0 0.0
  %545 = vmatprep.subr.mxu0 0.0
  %546 = vmatpush1.msra.mxu0 0.0
  %547 = vmatprep.subr.mxu0 0.0
  %548 = vmatpush1.msra.mxu0 0.0
  %549 = vmatprep.subr.mxu0 0.0
  %550 = vmatpush1.msra.mxu0 0.0
  %551 = vmatprep.subr.mxu0 0.0
  %552 = vmatpush1.msra.mxu0 0.0
  %553 = vmatprep.subr.mxu0 0.0
  %554 = vmatpush1.msra.mxu0 0.0
  %555 = vmatprep.subr.mxu0 0.0
  %556 = vmatpush1.msra.mxu0 0.0
  %557 = vmatprep.subr.mxu0 0.0
  %558 = vmatpush1.msra.mxu0 0.0
  %559 = vmatprep.subr.mxu0 0.0
  %560 = vmatpush1.msra.mxu0 0.0
  %561 = vmatprep.subr.mxu0 0.0
  %562 = vmatpush1.msra.mxu0 0.0
  %563 = vmatprep.mubr.f32.mxu0 0.0
  %564 = vmatmul.mubr.f32.gmra.mrb[0].mxu0 %v422
  %v565 = vpop.f32.mrb[0].mxu0
  %v566 = vadd.f32 %v419, %v565
  %v567 = vpop.f32.mrb[0].mxu0
  %v568 = vadd.f32 %v419, %v567
  %569 = vdwg.mxu0
  %v570 = vmax.f32 %v566, 0.0
  %v571 = vmax.f32 %v568, 0.0
  %v572 = vmin.f32 %v570, 6.0
  %v573 = vmin.f32 %v571, 6.0
  %574 = vmatprep.subr.mxu0 %v415
  %575 = vmatpush1.msra.mxu0 %v414
  %576 = vmatprep.subr.mxu0 0.0
  %577 = vmatpush1.msra.mxu0 0.0
  %578 = vmatprep.subr.mxu0 0.0
  %579 = vmatpush1.msra.mxu0 0.0
  %580 = vmatprep.subr.mxu0 0.0
  %581 = vmatpush1.msra.mxu0 0.0
  %582 = vmatprep.subr.mxu0 0.0
  %583 = vmatpush1.msra.mxu0 0.0
  %584 = vmatprep.subr.mxu0 0.0
  %585 = vmatpush1.msra.mxu0 0.0
  %586 = vmatprep.subr.mxu0 0.0
  %587 = vmatpush1.msra.mxu0 0.0
  %588 = vmatprep.subr.mxu0 0.0
  %589 = vmatpush1.msra.mxu0 0.0
  %590 = vmatprep.subr.mxu0 0.0
  %591 = vmatpush1.msra.mxu0 0.0
  %592 = vmatprep.subr.mxu0 0.0
  %593 = vmatpush1.msra.mxu0 0.0
  %594 = vmatprep.subr.mxu0 0.0
  %595 = vmatpush1.msra.mxu0 0.0
  %596 = vmatprep.subr.mxu0 0.0
  %597 = vmatpush1.msra.mxu0 0.0
  %598 = vmatprep.subr.mxu0 0.0
  %599 = vmatpush1.msra.mxu0 0.0
  %600 = vmatprep.subr.mxu0 0.0
  %601 = vmatpush1.msra.mxu0 0.0
  %602 = vmatprep.subr.mxu0 0.0
  %603 = vmatpush1.msra.mxu0 0.0
  %604 = vmatprep.subr.mxu0 0.0
  %605 = vmatpush1.msra.mxu0 0.0
  %606 = vmatprep.subr.mxu0 0.0
  %607 = vmatpush1.msra.mxu0 0.0
  %608 = vmatprep.subr.mxu0 0.0
  %609 = vmatpush1.msra.mxu0 0.0
  %610 = vmatprep.subr.mxu0 0.0
  %611 = vmatpush1.msra.mxu0 0.0
  %612 = vmatprep.subr.mxu0 0.0
  %613 = vmatpush1.msra.mxu0 0.0
  %614 = vmatprep.subr.mxu0 0.0
  %615 = vmatpush1.msra.mxu0 0.0
  %616 = vmatprep.subr.mxu0 0.0
  %617 = vmatpush1.msra.mxu0 0.0
  %618 = vmatprep.subr.mxu0 0.0
  %619 = vmatpush1.msra.mxu0 0.0
  %620 = vmatprep.subr.mxu0 0.0
  %621 = vmatpush1.msra.mxu0 0.0
  %622 = vmatprep.subr.mxu0 0.0
  %623 = vmatpush1.msra.mxu0 0.0
  %624 = vmatprep.subr.mxu0 0.0
  %625 = vmatpush1.msra.mxu0 0.0
  %626 = vmatprep.subr.mxu0 0.0
  %627 = vmatpush1.msra.mxu0 0.0
  %628 = vmatprep.subr.mxu0 0.0
  %629 = vmatpush1.msra.mxu0 0.0
  %630 = vmatprep.subr.mxu0 0.0
  %631 = vmatpush1.msra.mxu0 0.0
  %632 = vmatprep.subr.mxu0 0.0
  %633 = vmatpush1.msra.mxu0 0.0
  %634 = vmatprep.subr.mxu0 0.0
  %635 = vmatpush1.msra.mxu0 0.0
  %636 = vmatprep.subr.mxu0 0.0
  %637 = vmatpush1.msra.mxu0 0.0
  %638 = vmatprep.mubr.f32.mxu0 0.0
  %639 = vmatmul.mubr.f32.gmra.mrb[0].mxu0 %v422
  %v640 = vpop.f32.mrb[0].mxu0
  %v641 = vadd.f32 %v419, %v640
  %v642 = vpop.f32.mrb[0].mxu0
  %v643 = vadd.f32 %v419, %v642
  %644 = vdwg.mxu0
  %v645 = vmax.f32 %v641, 0.0
  %v646 = vmax.f32 %v643, 0.0
  %v647 = vmin.f32 %v645, 6.0
  %v648 = vmin.f32 %v646, 6.0
  %v650 = vsel %vm183, %v71, 0
  %652 = vmatprep.subr.mxu0 %v573
  %653 = vmatpush1.msra.mxu0 %v572
  %654 = vmatprep.subr.mxu0 0.0
  %655 = vmatpush1.msra.mxu0 0.0
  %656 = vmatprep.subr.mxu0 0.0
  %657 = vmatpush1.msra.mxu0 0.0
  %658 = vmatprep.subr.mxu0 0.0
  %659 = vmatpush1.msra.mxu0 0.0
  %660 = vmatprep.subr.mxu0 0.0
  %661 = vmatpush1.msra.mxu0 0.0
  %662 = vmatprep.subr.mxu0 0.0
  %663 = vmatpush1.msra.mxu0 0.0
  %664 = vmatprep.subr.mxu0 0.0
  %665 = vmatpush1.msra.mxu0 0.0
  %666 = vmatprep.subr.mxu0 0.0
  %667 = vmatpush1.msra.mxu0 0.0
  %668 = vmatprep.subr.mxu0 0.0
  %669 = vmatpush1.msra.mxu0 0.0
  %670 = vmatprep.subr.mxu0 0.0
  %671 = vmatpush1.msra.mxu0 0.0
  %672 = vmatprep.subr.mxu0 0.0
  %673 = vmatpush1.msra.mxu0 0.0
  %674 = vmatprep.subr.mxu0 0.0
  %675 = vmatpush1.msra.mxu0 0.0
  %676 = vmatprep.subr.mxu0 0.0
  %677 = vmatpush1.msra.mxu0 0.0
  %678 = vmatprep.subr.mxu0 0.0
  %679 = vmatpush1.msra.mxu0 0.0
  %680 = vmatprep.subr.mxu0 0.0
  %681 = vmatpush1.msra.mxu0 0.0
  %682 = vmatprep.subr.mxu0 0.0
  %683 = vmatpush1.msra.mxu0 0.0
  %684 = vmatprep.subr.mxu0 0.0
  %685 = vmatpush1.msra.mxu0 0.0
  %686 = vmatprep.subr.mxu0 0.0
  %687 = vmatpush1.msra.mxu0 0.0
  %688 = vmatprep.subr.mxu0 0.0
  %689 = vmatpush1.msra.mxu0 0.0
  %690 = vmatprep.subr.mxu0 0.0
  %691 = vmatpush1.msra.mxu0 0.0
  %692 = vmatprep.subr.mxu0 0.0
  %693 = vmatpush1.msra.mxu0 0.0
  %694 = vmatprep.subr.mxu0 0.0
  %695 = vmatpush1.msra.mxu0 0.0
  %696 = vmatprep.subr.mxu0 0.0
  %697 = vmatpush1.msra.mxu0 0.0
  %698 = vmatprep.subr.mxu0 0.0
  %699 = vmatpush1.msra.mxu0 0.0
  %700 = vmatprep.subr.mxu0 0.0
  %701 = vmatpush1.msra.mxu0 0.0
  %702 = vmatprep.subr.mxu0 0.0
  %703 = vmatpush1.msra.mxu0 0.0
  %704 = vmatprep.subr.mxu0 0.0
  %705 = vmatpush1.msra.mxu0 0.0
  %706 = vmatprep.subr.mxu0 0.0
  %707 = vmatpush1.msra.mxu0 0.0
  %708 = vmatprep.subr.mxu0 0.0
  %709 = vmatpush1.msra.mxu0 0.0
  %710 = vmatprep.subr.mxu0 0.0
  %711 = vmatpush1.msra.mxu0 0.0
  %712 = vmatprep.subr.mxu0 0.0
  %713 = vmatpush1.msra.mxu0 0.0
  %714 = vmatprep.subr.mxu0 0.0
  %715 = vmatpush1.msra.mxu0 0.0
  %716 = vmatprep.mubr.f32.mxu0 0.0
  %717 = vmatmul.mubr.f32.gmra.mrb[0].mxu0 %v650
  %v718 = vpop.f32.mrb[0].mxu0
  %v719 = vadd.f32 0.0, %v718
  %v720 = vpop.f32.mrb[0].mxu0
  %v721 = vadd.f32 0.0, %v720
  %722 = vdwg.mxu0
  %v724 = vsel %vm183, %v70, 0
  %726 = vmatprep.subr.mxu0 %v498
  %727 = vmatpush1.msra.mxu0 %v497
  %728 = vmatprep.subr.mxu0 0.0
  %729 = vmatpush1.msra.mxu0 0.0
  %730 = vmatprep.subr.mxu0 0.0
  %731 = vmatpush1.msra.mxu0 0.0
  %732 = vmatprep.subr.mxu0 0.0
  %733 = vmatpush1.msra.mxu0 0.0
  %734 = vmatprep.subr.mxu0 0.0
  %735 = vmatpush1.msra.mxu0 0.0
  %736 = vmatprep.subr.mxu0 0.0
  %737 = vmatpush1.msra.mxu0 0.0
  %738 = vmatprep.subr.mxu0 0.0
  %739 = vmatpush1.msra.mxu0 0.0
  %740 = vmatprep.subr.mxu0 0.0
  %741 = vmatpush1.msra.mxu0 0.0
  %742 = vmatprep.subr.mxu0 0.0
  %743 = vmatpush1.msra.mxu0 0.0
  %744 = vmatprep.subr.mxu0 0.0
  %745 = vmatpush1.msra.mxu0 0.0
  %746 = vmatprep.subr.mxu0 0.0
  %747 = vmatpush1.msra.mxu0 0.0
  %748 = vmatprep.subr.mxu0 0.0
  %749 = vmatpush1.msra.mxu0 0.0
  %750 = vmatprep.subr.mxu0 0.0
  %751 = vmatpush1.msra.mxu0 0.0
  %752 = vmatprep.subr.mxu0 0.0
  %753 = vmatpush1.msra.mxu0 0.0
  %754 = vmatprep.subr.mxu0 0.0
  %755 = vmatpush1.msra.mxu0 0.0
  %756 = vmatprep.subr.mxu0 0.0
  %757 = vmatpush1.msra.mxu0 0.0
  %758 = vmatprep.subr.mxu0 0.0
  %759 = vmatpush1.msra.mxu0 0.0
  %760 = vmatprep.subr.mxu0 0.0
  %761 = vmatpush1.msra.mxu0 0.0
  %762 = vmatprep.subr.mxu0 0.0
  %763 = vmatpush1.msra.mxu0 0.0
  %764 = vmatprep.subr.mxu0 0.0
  %765 = vmatpush1.msra.mxu0 0.0
  %766 = vmatprep.subr.mxu0 0.0
  %767 = vmatpush1.msra.mxu0 0.0
  %768 = vmatprep.subr.mxu0 0.0
  %769 = vmatpush1.msra.mxu0 0.0
  %770 = vmatprep.subr.mxu0 0.0
  %771 = vmatpush1.msra.mxu0 0.0
  %772 = vmatprep.subr.mxu0 0.0
  %773 = vmatpush1.msra.mxu0 0.0
  %774 = vmatprep.subr.mxu0 0.0
  %775 = vmatpush1.msra.mxu0 0.0
  %776 = vmatprep.subr.mxu0 0.0
  %777 = vmatpush1.msra.mxu0 0.0
  %778 = vmatprep.subr.mxu0 0.0
  %779 = vmatpush1.msra.mxu0 0.0
  %780 = vmatprep.subr.mxu0 0.0
  %781 = vmatpush1.msra.mxu0 0.0
  %782 = vmatprep.subr.mxu0 0.0
  %783 = vmatpush1.msra.mxu0 0.0
  %784 = vmatprep.subr.mxu0 0.0
  %785 = vmatpush1.msra.mxu0 0.0
  %786 = vmatprep.subr.mxu0 0.0
  %787 = vmatpush1.msra.mxu0 0.0
  %788 = vmatprep.subr.mxu0 0.0
  %789 = vmatpush1.msra.mxu0 0.0
  %790 = vmatprep.mubr.f32.mxu0 0.0
  %791 = vmatmul.mubr.f32.gmra.mrb[0].mxu0 %v724
  %v792 = vpop.f32.mrb[0].mxu0
  %v793 = vadd.f32 %v719, %v792
  %v794 = vpop.f32.mrb[0].mxu0
  %v795 = vadd.f32 %v721, %v794
  %796 = vdwg.mxu0
  %v798 = vsel %vm183, %v72, 0
  %800 = vmatprep.subr.mxu0 %v648
  %801 = vmatpush1.msra.mxu0 %v647
  %802 = vmatprep.subr.mxu0 0.0
  %803 = vmatpush1.msra.mxu0 0.0
  %804 = vmatprep.subr.mxu0 0.0
  %805 = vmatpush1.msra.mxu0 0.0
  %806 = vmatprep.subr.mxu0 0.0
  %807 = vmatpush1.msra.mxu0 0.0
  %808 = vmatprep.subr.mxu0 0.0
  %809 = vmatpush1.msra.mxu0 0.0
  %810 = vmatprep.subr.mxu0 0.0
  %811 = vmatpush1.msra.mxu0 0.0
  %812 = vmatprep.subr.mxu0 0.0
  %813 = vmatpush1.msra.mxu0 0.0
  %814 = vmatprep.subr.mxu0 0.0
  %815 = vmatpush1.msra.mxu0 0.0
  %816 = vmatprep.subr.mxu0 0.0
  %817 = vmatpush1.msra.mxu0 0.0
  %818 = vmatprep.subr.mxu0 0.0
  %819 = vmatpush1.msra.mxu0 0.0
  %820 = vmatprep.subr.mxu0 0.0
  %821 = vmatpush1.msra.mxu0 0.0
  %822 = vmatprep.subr.mxu0 0.0
  %823 = vmatpush1.msra.mxu0 0.0
  %824 = vmatprep.subr.mxu0 0.0
  %825 = vmatpush1.msra.mxu0 0.0
  %826 = vmatprep.subr.mxu0 0.0
  %827 = vmatpush1.msra.mxu0 0.0
  %828 = vmatprep.subr.mxu0 0.0
  %829 = vmatpush1.msra.mxu0 0.0
  %830 = vmatprep.subr.mxu0 0.0
  %831 = vmatpush1.msra.mxu0 0.0
  %832 = vmatprep.subr.mxu0 0.0
  %833 = vmatpush1.msra.mxu0 0.0
  %834 = vmatprep.subr.mxu0 0.0
  %835 = vmatpush1.msra.mxu0 0.0
  %836 = vmatprep.subr.mxu0 0.0
  %837 = vmatpush1.msra.mxu0 0.0
  %838 = vmatprep.subr.mxu0 0.0
  %839 = vmatpush1.msra.mxu0 0.0
  %840 = vmatprep.subr.mxu0 0.0
  %841 = vmatpush1.msra.mxu0 0.0
  %842 = vmatprep.subr.mxu0 0.0
  %843 = vmatpush1.msra.mxu0 0.0
  %844 = vmatprep.subr.mxu0 0.0
  %845 = vmatpush1.msra.mxu0 0.0
  %846 = vmatprep.subr.mxu0 0.0
  %847 = vmatpush1.msra.mxu0 0.0
  %848 = vmatprep.subr.mxu0 0.0
  %849 = vmatpush1.msra.mxu0 0.0
  %850 = vmatprep.subr.mxu0 0.0
  %851 = vmatpush1.msra.mxu0 0.0
  %852 = vmatprep.subr.mxu0 0.0
  %853 = vmatpush1.msra.mxu0 0.0
  %854 = vmatprep.subr.mxu0 0.0
  %855 = vmatpush1.msra.mxu0 0.0
  %856 = vmatprep.subr.mxu0 0.0
  %857 = vmatpush1.msra.mxu0 0.0
  %858 = vmatprep.subr.mxu0 0.0
  %859 = vmatpush1.msra.mxu0 0.0
  %860 = vmatprep.subr.mxu0 0.0
  %861 = vmatpush1.msra.mxu0 0.0
  %862 = vmatprep.subr.mxu0 0.0
  %863 = vmatpush1.msra.mxu0 0.0
  %864 = vmatprep.mubr.f32.mxu0 0.0
  %865 = vmatmul.mubr.f32.gmra.mrb[0].mxu0 %v798
  %v866 = vpop.f32.mrb[0].mxu0
  %v867 = vadd.f32 0.0, %v866
  %v868 = vpop.f32.mrb[0].mxu0
  %v869 = vadd.f32 0.0, %v868
  %870 = vdwg.mxu0
  %v871 = vadd.f32 %v793, %v867
  %v872 = vadd.f32 %v795, %v869
  %874 = vset.pattern.permute.xlu0 0
  %875 = vperm.xlu0 %874, %v73
  %v876 = vpop.permute.xlu0 %875
  %v878 = vadd.f32 %v871, %v876
  %v879 = vadd.f32 %v872, %v876
  %v882 = vrot.slane %v878, 1
  %v883 = vrot.slane %v879, 1
  %v886 = vmax.f32 %v878, %v882
  %v887 = vmax.f32 %v879, %v883
  %v888 = vrot.slane %v878, 2
  %v889 = vrot.slane %v879, 2
  %v892 = vmax.f32 %v886, %v888
  %v893 = vmax.f32 %v887, %v889
  %v894 = vsub.f32 %v878, %v892
  %v895 = vsub.f32 %v879, %v893
  %v896 = vmul.f32 %v894, 1.442695
  %v897 = vpow.pop %v896
  %v898 = vmul.f32 %v895, 1.442695
  %v899 = vpow.pop %v898
  %v902 = vrot.slane %v892, 7
  %v903 = vrot.slane %v893, 7
  %v906 = vsub.f32 %v878, %v902
  %v907 = vsub.f32 %v879, %v903
  %v908 = vmul.f32 %v906, 1.442695
  %v909 = vpow.pop %v908
  %v910 = vmul.f32 %v907, 1.442695
  %v911 = vpow.pop %v910
  %v912 = vrot.slane %v892, 6
  %v913 = vrot.slane %v893, 6
  %v916 = vsub.f32 %v878, %v912
  %v917 = vsub.f32 %v879, %v913
  %v918 = vmul.f32 %v916, 1.442695
  %v919 = vpow.pop %v918
  %v920 = vmul.f32 %v917, 1.442695
  %v921 = vpow.pop %v920
  %v924 = vrot.slane %v909, 1
  %v925 = vrot.slane %v911, 1
  %v928 = vadd.f32 %v897, %v924
  %v929 = vadd.f32 %v899, %v925
  %v932 = vrot.slane %v919, 2
  %v933 = vrot.slane %v921, 2
  %v936 = vadd.f32 %v928, %v932
  %v937 = vadd.f32 %v929, %v933
  %v938 = vrcp.pop %v936
  %v939 = vrcp.pop %v937
  %v940 = vmul.f32 %v938, 2.0
  %v941 = vmul.f32 %v939, 2.0
  %v942 = vmul.f32 %v897, %v940
  %v943 = vmul.f32 %v899, %v941
  %v944 = vlaneseq
  %v945 = vshrl.u32 %v944, 7
  %v946 = vsub.s32 0, %v945
  %v947 = vrot.slane %v942, %v946
  %v948 = vlaneseq
  %v949 = vshrl.u32 %v948, 7
  %v950 = vsub.s32 0, %v949
  %v951 = vrot.slane %v943, %v950
  %v952 = vmul.f32 %v176, %v947
  %v953 = vmul.f32 %v177, %v951
  %v956 = vrot.slane %v940, 7
  %v957 = vrot.slane %v941, 7
  %v960 = vmul.f32 %v909, %v956
  %v961 = vmul.f32 %v911, %v957
  %v962 = vlaneseq
  %v963 = vshrl.u32 %v962, 7
  %v964 = vsub.s32 1, %v963
  %v965 = vrot.slane %v960, %v964
  %v966 = vlaneseq
  %v967 = vshrl.u32 %v966, 7
  %v968 = vsub.s32 1, %v967
  %v969 = vrot.slane %v961, %v968
  %v970 = vmul.f32 %v260, %v965
  %v971 = vmul.f32 %v261, %v969
  %v972 = vadd.f32 %v952, %v970
  %v973 = vadd.f32 %v953, %v971
  %v974 = vrot.slane %v940, 6
  %v975 = vrot.slane %v941, 6
  %v978 = vmul.f32 %v919, %v974
  %v979 = vmul.f32 %v921, %v975
  %v980 = vlaneseq
  %v981 = vshrl.u32 %v980, 7
  %v982 = vsub.s32 2, %v981
  %v983 = vrot.slane %v978, %v982
  %v984 = vlaneseq
  %v985 = vshrl.u32 %v984, 7
  %v986 = vsub.s32 2, %v985
  %v987 = vrot.slane %v979, %v986
  %v988 = vmul.f32 %v414, %v983
  %v989 = vmul.f32 %v415, %v987
  %v990 = vadd.f32 %v972, %v988
  %v991 = vadd.f32 %v973, %v989
  %992 = vst [vmem:[%s15] sm:$0xff] %v990
  %993 = vst [vmem:[%s15 + $0x8] sm:$0xff] %v991
  %s994 = scalar_lea.vmem %s0, 4
  %v995 = vld [vmem:[%s994] sm:$0xf]
  %v996 = vunpack.c.l.bf16 %v995
  %s997 = scalar_lea.vmem %s1, 16
  %v998 = vld [vmem:[%s997] sm:$0xff]
  %v999 = vld [vmem:[%s997 + $0x8] sm:$0xff]
  %s1000 = scalar_lea.vmem %s2, 24
  %v1001 = vld [vmem:[%s1000] sm:$0xff]
  %v1002 = vld [vmem:[%s1000 + $0x8] sm:$0xff]
  %v1003 = vld [vmem:[%s1000 + $0x10] sm:$0xff]
  %v1004 = vunpack.c.l.bf16 %v1001
  %v1005 = vunpack.c.h.bf16 %v1001
  %v1006 = vunpack.c.l.bf16 %v1002
  %v1007 = vunpack.c.h.bf16 %v1002
  %v1008 = vunpack.c.l.bf16 %v1003
  %v1009 = vunpack.c.h.bf16 %v1003
  %v1011 = vcombine.high %v996, %v996
  %v1012 = vsel %vm98, %v996, 0
  %v1014 = vsel %vm98, %v1011, 0
  %1016 = vmatprep.subr.mxu0 %v1014
  %1017 = vmatpush1.msra.mxu0 %v1012
  %1018 = vmatprep.subr.mxu0 0.0
  %1019 = vmatpush1.msra.mxu0 0.0
  %1020 = vmatprep.subr.mxu0 0.0
  %1021 = vmatpush1.msra.mxu0 0.0
  %1022 = vmatprep.subr.mxu0 0.0
  %1023 = vmatpush1.msra.mxu0 0.0
  %1024 = vmatprep.subr.mxu0 0.0
  %1025 = vmatpush1.msra.mxu0 0.0
  %1026 = vmatprep.subr.mxu0 0.0
  %1027 = vmatpush1.msra.mxu0 0.0
  %1028 = vmatprep.subr.mxu0 0.0
  %1029 = vmatpush1.msra.mxu0 0.0
  %1030 = vmatprep.subr.mxu0 0.0
  %1031 = vmatpush1.msra.mxu0 0.0
  %1032 = vmatprep.subr.mxu0 0.0
  %1033 = vmatpush1.msra.mxu0 0.0
  %1034 = vmatprep.subr.mxu0 0.0
  %1035 = vmatpush1.msra.mxu0 0.0
  %1036 = vmatprep.subr.mxu0 0.0
  %1037 = vmatpush1.msra.mxu0 0.0
  %1038 = vmatprep.subr.mxu0 0.0
  %1039 = vmatpush1.msra.mxu0 0.0
  %1040 = vmatprep.subr.mxu0 0.0
  %1041 = vmatpush1.msra.mxu0 0.0
  %1042 = vmatprep.subr.mxu0 0.0
  %1043 = vmatpush1.msra.mxu0 0.0
  %1044 = vmatprep.subr.mxu0 0.0
  %1045 = vmatpush1.msra.mxu0 0.0
  %1046 = vmatprep.subr.mxu0 0.0
  %1047 = vmatpush1.msra.mxu0 0.0
  %1048 = vmatprep.subr.mxu0 0.0
  %1049 = vmatpush1.msra.mxu0 0.0
  %1050 = vmatprep.subr.mxu0 0.0
  %1051 = vmatpush1.msra.mxu0 0.0
  %1052 = vmatprep.subr.mxu0 0.0
  %1053 = vmatpush1.msra.mxu0 0.0
  %1054 = vmatprep.subr.mxu0 0.0
  %1055 = vmatpush1.msra.mxu0 0.0
  %1056 = vmatprep.subr.mxu0 0.0
  %1057 = vmatpush1.msra.mxu0 0.0
  %1058 = vmatprep.subr.mxu0 0.0
  %1059 = vmatpush1.msra.mxu0 0.0
  %1060 = vmatprep.subr.mxu0 0.0
  %1061 = vmatpush1.msra.mxu0 0.0
  %1062 = vmatprep.subr.mxu0 0.0
  %1063 = vmatpush1.msra.mxu0 0.0
  %1064 = vmatprep.subr.mxu0 0.0
  %1065 = vmatpush1.msra.mxu0 0.0
  %1066 = vmatprep.subr.mxu0 0.0
  %1067 = vmatpush1.msra.mxu0 0.0
  %1068 = vmatprep.subr.mxu0 0.0
  %1069 = vmatpush1.msra.mxu0 0.0
  %1070 = vmatprep.subr.mxu0 0.0
  %1071 = vmatpush1.msra.mxu0 0.0
  %1072 = vmatprep.subr.mxu0 0.0
  %1073 = vmatpush1.msra.mxu0 0.0
  %1074 = vmatprep.subr.mxu0 0.0
  %1075 = vmatpush1.msra.mxu0 0.0
  %1076 = vmatprep.subr.mxu0 0.0
  %1077 = vmatpush1.msra.mxu0 0.0
  %1078 = vmatprep.subr.mxu0 0.0
  %1079 = vmatpush1.msra.mxu0 0.0
  %1080 = vmatprep.mubr.f32.mxu0 0.0
  %1081 = vmatmul.mubr.f32.gmra.mrb[0].mxu0 %v96
  %v1082 = vpop.f32.mrb[0].mxu0
  %v1083 = vadd.f32 %v90, %v1082
  %v1084 = vpop.f32.mrb[0].mxu0
  %v1085 = vadd.f32 %v90, %v1084
  %1086 = vdwg.mxu0
  %v1087 = vmax.f32 %v1083, 0.0
  %v1088 = vmax.f32 %v1085, 0.0
  %v1089 = vmin.f32 %v1087, 6.0
  %v1090 = vmin.f32 %v1088, 6.0
  %1091 = vmatprep.subr.mxu0 %v999
  %1092 = vmatpush1.msra.mxu0 %v998
  %1093 = vmatprep.subr.mxu0 0.0
  %1094 = vmatpush1.msra.mxu0 0.0
  %1095 = vmatprep.subr.mxu0 0.0
  %1096 = vmatpush1.msra.mxu0 0.0
  %1097 = vmatprep.subr.mxu0 0.0
  %1098 = vmatpush1.msra.mxu0 0.0
  %1099 = vmatprep.subr.mxu0 0.0
  %1100 = vmatpush1.msra.mxu0 0.0
  %1101 = vmatprep.subr.mxu0 0.0
  %1102 = vmatpush1.msra.mxu0 0.0
  %1103 = vmatprep.subr.mxu0 0.0
  %1104 = vmatpush1.msra.mxu0 0.0
  %1105 = vmatprep.subr.mxu0 0.0
  %1106 = vmatpush1.msra.mxu0 0.0
  %1107 = vmatprep.subr.mxu0 0.0
  %1108 = vmatpush1.msra.mxu0 0.0
  %1109 = vmatprep.subr.mxu0 0.0
  %1110 = vmatpush1.msra.mxu0 0.0
  %1111 = vmatprep.subr.mxu0 0.0
  %1112 = vmatpush1.msra.mxu0 0.0
  %1113 = vmatprep.subr.mxu0 0.0
  %1114 = vmatpush1.msra.mxu0 0.0
  %1115 = vmatprep.subr.mxu0 0.0
  %1116 = vmatpush1.msra.mxu0 0.0
  %1117 = vmatprep.subr.mxu0 0.0
  %1118 = vmatpush1.msra.mxu0 0.0
  %1119 = vmatprep.subr.mxu0 0.0
  %1120 = vmatpush1.msra.mxu0 0.0
  %1121 = vmatprep.subr.mxu0 0.0
  %1122 = vmatpush1.msra.mxu0 0.0
  %1123 = vmatprep.subr.mxu0 0.0
  %1124 = vmatpush1.msra.mxu0 0.0
  %1125 = vmatprep.subr.mxu0 0.0
  %1126 = vmatpush1.msra.mxu0 0.0
  %1127 = vmatprep.subr.mxu0 0.0
  %1128 = vmatpush1.msra.mxu0 0.0
  %1129 = vmatprep.subr.mxu0 0.0
  %1130 = vmatpush1.msra.mxu0 0.0
  %1131 = vmatprep.subr.mxu0 0.0
  %1132 = vmatpush1.msra.mxu0 0.0
  %1133 = vmatprep.subr.mxu0 0.0
  %1134 = vmatpush1.msra.mxu0 0.0
  %1135 = vmatprep.subr.mxu0 0.0
  %1136 = vmatpush1.msra.mxu0 0.0
  %1137 = vmatprep.subr.mxu0 0.0
  %1138 = vmatpush1.msra.mxu0 0.0
  %1139 = vmatprep.subr.mxu0 0.0
  %1140 = vmatpush1.msra.mxu0 0.0
  %1141 = vmatprep.subr.mxu0 0.0
  %1142 = vmatpush1.msra.mxu0 0.0
  %1143 = vmatprep.subr.mxu0 0.0
  %1144 = vmatpush1.msra.mxu0 0.0
  %1145 = vmatprep.subr.mxu0 0.0
  %1146 = vmatpush1.msra.mxu0 0.0
  %1147 = vmatprep.subr.mxu0 0.0
  %1148 = vmatpush1.msra.mxu0 0.0
  %1149 = vmatprep.subr.mxu0 0.0
  %1150 = vmatpush1.msra.mxu0 0.0
  %1151 = vmatprep.subr.mxu0 0.0
  %1152 = vmatpush1.msra.mxu0 0.0
  %1153 = vmatprep.subr.mxu0 0.0
  %1154 = vmatpush1.msra.mxu0 0.0
  %1155 = vmatprep.mubr.f32.mxu0 0.0
  %1156 = vmatmul.mubr.f32.gmra.mrb[0].mxu0 %v185
  %v1157 = vpop.f32.mrb[0].mxu0
  %v1158 = vadd.f32 %v181, %v1157
  %v1159 = vpop.f32.mrb[0].mxu0
  %v1160 = vadd.f32 %v181, %v1159
  %1161 = vdwg.mxu0
  %v1162 = vmax.f32 %v1158, 0.0
  %v1163 = vmax.f32 %v1160, 0.0
  %v1164 = vmin.f32 %v1162, 6.0
  %v1165 = vmin.f32 %v1163, 6.0
  %1166 = vmatprep.subr.mxu0 %v1005
  %1167 = vmatpush1.msra.mxu0 %v1004
  %1168 = vmatprep.subr.mxu0 %v1007
  %1169 = vmatpush1.msra.mxu0 %v1006
  %1170 = vmatprep.subr.mxu0 %v1009
  %1171 = vmatpush1.msra.mxu0 %v1008
  %1172 = vmatprep.subr.mxu0 0.0
  %1173 = vmatpush1.msra.mxu0 0.0
  %1174 = vmatprep.subr.mxu0 0.0
  %1175 = vmatpush1.msra.mxu0 0.0
  %1176 = vmatprep.subr.mxu0 0.0
  %1177 = vmatpush1.msra.mxu0 0.0
  %1178 = vmatprep.subr.mxu0 0.0
  %1179 = vmatpush1.msra.mxu0 0.0
  %1180 = vmatprep.subr.mxu0 0.0
  %1181 = vmatpush1.msra.mxu0 0.0
  %1182 = vmatprep.subr.mxu0 0.0
  %1183 = vmatpush1.msra.mxu0 0.0
  %1184 = vmatprep.subr.mxu0 0.0
  %1185 = vmatpush1.msra.mxu0 0.0
  %1186 = vmatprep.subr.mxu0 0.0
  %1187 = vmatpush1.msra.mxu0 0.0
  %1188 = vmatprep.subr.mxu0 0.0
  %1189 = vmatpush1.msra.mxu0 0.0
  %1190 = vmatprep.subr.mxu0 0.0
  %1191 = vmatpush1.msra.mxu0 0.0
  %1192 = vmatprep.subr.mxu0 0.0
  %1193 = vmatpush1.msra.mxu0 0.0
  %1194 = vmatprep.subr.mxu0 0.0
  %1195 = vmatpush1.msra.mxu0 0.0
  %1196 = vmatprep.subr.mxu0 0.0
  %1197 = vmatpush1.msra.mxu0 0.0
  %1198 = vmatprep.subr.mxu0 0.0
  %1199 = vmatpush1.msra.mxu0 0.0
  %1200 = vmatprep.subr.mxu0 0.0
  %1201 = vmatpush1.msra.mxu0 0.0
  %1202 = vmatprep.subr.mxu0 0.0
  %1203 = vmatpush1.msra.mxu0 0.0
  %1204 = vmatprep.subr.mxu0 0.0
  %1205 = vmatpush1.msra.mxu0 0.0
  %1206 = vmatprep.subr.mxu0 0.0
  %1207 = vmatpush1.msra.mxu0 0.0
  %1208 = vmatprep.subr.mxu0 0.0
  %1209 = vmatpush1.msra.mxu0 0.0
  %1210 = vmatprep.subr.mxu0 0.0
  %1211 = vmatpush1.msra.mxu0 0.0
  %1212 = vmatprep.subr.mxu0 0.0
  %1213 = vmatpush1.msra.mxu0 0.0
  %1214 = vmatprep.subr.mxu0 0.0
  %1215 = vmatpush1.msra.mxu0 0.0
  %1216 = vmatprep.subr.mxu0 0.0
  %1217 = vmatpush1.msra.mxu0 0.0
  %1218 = vmatprep.subr.mxu0 0.0
  %1219 = vmatpush1.msra.mxu0 0.0
  %1220 = vmatprep.subr.mxu0 0.0
  %1221 = vmatpush1.msra.mxu0 0.0
  %1222 = vmatprep.subr.mxu0 0.0
  %1223 = vmatpush1.msra.mxu0 0.0
  %1224 = vmatprep.subr.mxu0 0.0
  %1225 = vmatpush1.msra.mxu0 0.0
  %1226 = vmatprep.subr.mxu0 0.0
  %1227 = vmatpush1.msra.mxu0 0.0
  %1228 = vmatprep.subr.mxu0 0.0
  %1229 = vmatpush1.msra.mxu0 0.0
  %1230 = vmatprep.mubr.f32.mxu0 0.0
  %1231 = vmatmul.mubr.f32.gmra.mrb[0].mxu0 %v264
  %v1232 = vpop.f32.mrb[0].mxu0
  %v1233 = vadd.f32 0.0, %v1232
  %v1234 = vpop.f32.mrb[0].mxu0
  %v1235 = vadd.f32 0.0, %v1234
  %1236 = vmatprep.mubr.f32.mxu0 0.0
  %1237 = vmatmul.mubr.f32.gmra.mrb[0].mxu0 %v267
  %v1238 = vpop.f32.mrb[0].mxu0
  %v1239 = vadd.f32 0.0, %v1238
  %v1240 = vpop.f32.mrb[0].mxu0
  %v1241 = vadd.f32 0.0, %v1240
  %1242 = vmatprep.mubr.f32.mxu0 0.0
  %1243 = vmatmul.mubr.f32.gmra.mrb[0].mxu0 %v270
  %v1244 = vpop.f32.mrb[0].mxu0
  %v1245 = vadd.f32 0.0, %v1244
  %v1246 = vpop.f32.mrb[0].mxu0
  %v1247 = vadd.f32 0.0, %v1246
  %1248 = vmatprep.mubr.f32.mxu0 0.0
  %1249 = vmatmul.mubr.f32.gmra.mrb[0].mxu0 %v273
  %v1250 = vpop.f32.mrb[0].mxu0
  %v1251 = vadd.f32 0.0, %v1250
  %v1252 = vpop.f32.mrb[0].mxu0
  %v1253 = vadd.f32 0.0, %v1252
  %1254 = vdwg.mxu0
  %1255 = vrot.lane.b32.xlu0 %v1239, 16
  %v1256 = vpop.permute.xlu0 %1255
  %1257 = vrot.lane.b32.xlu0 %v1241, 16
  %v1258 = vpop.permute.xlu0 %1257
  %v1259 = vsel %vm368, %v1256, %v1258
  %v1260 = vsel %vm368, %v1258, %v1256
  %v1261 = vsel %vm373, %v1260, 0.0
  %v1262 = vsel %vm374, %v1259, 0.0
  %1263 = vrot.lane.b32.xlu0 %v1245, 1
  %v1264 = vpop.permute.xlu0 %1263
  %1265 = vrot.lane.b32.xlu0 %v1247, 1
  %v1266 = vpop.permute.xlu0 %1265
  %v1267 = vsel %vm381, %v1264, %v1266
  %v1268 = vsel %vm381, %v1266, %v1264
  %1269 = vrot.lane.b32.xlu0 %v1251, 17
  %v1270 = vpop.permute.xlu0 %1269
  %1271 = vrot.lane.b32.xlu0 %v1253, 17
  %v1272 = vpop.permute.xlu0 %1271
  %v1273 = vsel %vm388, %v1270, %v1272
  %v1274 = vsel %vm388, %v1272, %v1270
  %v1275 = vsel %vm373, %v1274, 0.0
  %v1276 = vsel %vm374, %v1273, 0.0
  %v1277 = vadd.f32 %v1268, %v1275
  %v1278 = vadd.f32 %v1267, %v1276
  %v1279 = vsel %vm397, %v1277, 0.0
  %v1280 = vsel %vm398, %v1278, 0.0
  %v1281 = vadd.f32 %v1233, %v1261
  %v1282 = vadd.f32 %v1235, %v1262
  %v1283 = vadd.f32 %v1281, %v1279
  %v1284 = vadd.f32 %v1282, %v1280
  %v1285 = vadd.f32 %v1283, %v408
  %v1286 = vadd.f32 %v1284, %v408
  %v1287 = vmax.f32 %v1285, 0.0
  %v1288 = vmax.f32 %v1286, 0.0
  %v1289 = vmin.f32 %v1287, 6.0
  %v1290 = vmin.f32 %v1288, 6.0
  %1291 = vmatprep.subr.mxu0 %v1090
  %1292 = vmatpush1.msra.mxu0 %v1089
  %1293 = vmatprep.subr.mxu0 0.0
  %1294 = vmatpush1.msra.mxu0 0.0
  %1295 = vmatprep.subr.mxu0 0.0
  %1296 = vmatpush1.msra.mxu0 0.0
  %1297 = vmatprep.subr.mxu0 0.0
  %1298 = vmatpush1.msra.mxu0 0.0
  %1299 = vmatprep.subr.mxu0 0.0
  %1300 = vmatpush1.msra.mxu0 0.0
  %1301 = vmatprep.subr.mxu0 0.0
  %1302 = vmatpush1.msra.mxu0 0.0
  %1303 = vmatprep.subr.mxu0 0.0
  %1304 = vmatpush1.msra.mxu0 0.0
  %1305 = vmatprep.subr.mxu0 0.0
  %1306 = vmatpush1.msra.mxu0 0.0
  %1307 = vmatprep.subr.mxu0 0.0
  %1308 = vmatpush1.msra.mxu0 0.0
  %1309 = vmatprep.subr.mxu0 0.0
  %1310 = vmatpush1.msra.mxu0 0.0
  %1311 = vmatprep.subr.mxu0 0.0
  %1312 = vmatpush1.msra.mxu0 0.0
  %1313 = vmatprep.subr.mxu0 0.0
  %1314 = vmatpush1.msra.mxu0 0.0
  %1315 = vmatprep.subr.mxu0 0.0
  %1316 = vmatpush1.msra.mxu0 0.0
  %1317 = vmatprep.subr.mxu0 0.0
  %1318 = vmatpush1.msra.mxu0 0.0
  %1319 = vmatprep.subr.mxu0 0.0
  %1320 = vmatpush1.msra.mxu0 0.0
  %1321 = vmatprep.subr.mxu0 0.0
  %1322 = vmatpush1.msra.mxu0 0.0
  %1323 = vmatprep.subr.mxu0 0.0
  %1324 = vmatpush1.msra.mxu0 0.0
  %1325 = vmatprep.subr.mxu0 0.0
  %1326 = vmatpush1.msra.mxu0 0.0
  %1327 = vmatprep.subr.mxu0 0.0
  %1328 = vmatpush1.msra.mxu0 0.0
  %1329 = vmatprep.subr.mxu0 0.0
  %1330 = vmatpush1.msra.mxu0 0.0
  %1331 = vmatprep.subr.mxu0 0.0
  %1332 = vmatpush1.msra.mxu0 0.0
  %1333 = vmatprep.subr.mxu0 0.0
  %1334 = vmatpush1.msra.mxu0 0.0
  %1335 = vmatprep.subr.mxu0 0.0
  %1336 = vmatpush1.msra.mxu0 0.0
  %1337 = vmatprep.subr.mxu0 0.0
  %1338 = vmatpush1.msra.mxu0 0.0
  %1339 = vmatprep.subr.mxu0 0.0
  %1340 = vmatpush1.msra.mxu0 0.0
  %1341 = vmatprep.subr.mxu0 0.0
  %1342 = vmatpush1.msra.mxu0 0.0
  %1343 = vmatprep.subr.mxu0 0.0
  %1344 = vmatpush1.msra.mxu0 0.0
  %1345 = vmatprep.subr.mxu0 0.0
  %1346 = vmatpush1.msra.mxu0 0.0
  %1347 = vmatprep.subr.mxu0 0.0
  %1348 = vmatpush1.msra.mxu0 0.0
  %1349 = vmatprep.subr.mxu0 0.0
  %1350 = vmatpush1.msra.mxu0 0.0
  %1351 = vmatprep.subr.mxu0 0.0
  %1352 = vmatpush1.msra.mxu0 0.0
  %1353 = vmatprep.subr.mxu0 0.0
  %1354 = vmatpush1.msra.mxu0 0.0
  %1355 = vmatprep.mubr.f32.mxu0 0.0
  %1356 = vmatmul.mubr.f32.gmra.mrb[0].mxu0 %v422
  %v1357 = vpop.f32.mrb[0].mxu0
  %v1358 = vadd.f32 %v419, %v1357
  %v1359 = vpop.f32.mrb[0].mxu0
  %v1360 = vadd.f32 %v419, %v1359
  %1361 = vdwg.mxu0
  %v1362 = vmax.f32 %v1358, 0.0
  %v1363 = vmax.f32 %v1360, 0.0
  %v1364 = vmin.f32 %v1362, 6.0
  %v1365 = vmin.f32 %v1363, 6.0
  %1366 = vmatprep.subr.mxu0 %v1165
  %1367 = vmatpush1.msra.mxu0 %v1164
  %1368 = vmatprep.subr.mxu0 0.0
  %1369 = vmatpush1.msra.mxu0 0.0
  %1370 = vmatprep.subr.mxu0 0.0
  %1371 = vmatpush1.msra.mxu0 0.0
  %1372 = vmatprep.subr.mxu0 0.0
  %1373 = vmatpush1.msra.mxu0 0.0
  %1374 = vmatprep.subr.mxu0 0.0
  %1375 = vmatpush1.msra.mxu0 0.0
  %1376 = vmatprep.subr.mxu0 0.0
  %1377 = vmatpush1.msra.mxu0 0.0
  %1378 = vmatprep.subr.mxu0 0.0
  %1379 = vmatpush1.msra.mxu0 0.0
  %1380 = vmatprep.subr.mxu0 0.0
  %1381 = vmatpush1.msra.mxu0 0.0
  %1382 = vmatprep.subr.mxu0 0.0
  %1383 = vmatpush1.msra.mxu0 0.0
  %1384 = vmatprep.subr.mxu0 0.0
  %1385 = vmatpush1.msra.mxu0 0.0
  %1386 = vmatprep.subr.mxu0 0.0
  %1387 = vmatpush1.msra.mxu0 0.0
  %1388 = vmatprep.subr.mxu0 0.0
  %1389 = vmatpush1.msra.mxu0 0.0
  %1390 = vmatprep.subr.mxu0 0.0
  %1391 = vmatpush1.msra.mxu0 0.0
  %1392 = vmatprep.subr.mxu0 0.0
  %1393 = vmatpush1.msra.mxu0 0.0
  %1394 = vmatprep.subr.mxu0 0.0
  %1395 = vmatpush1.msra.mxu0 0.0
  %1396 = vmatprep.subr.mxu0 0.0
  %1397 = vmatpush1.msra.mxu0 0.0
  %1398 = vmatprep.subr.mxu0 0.0
  %1399 = vmatpush1.msra.mxu0 0.0
  %1400 = vmatprep.subr.mxu0 0.0
  %1401 = vmatpush1.msra.mxu0 0.0
  %1402 = vmatprep.subr.mxu0 0.0
  %1403 = vmatpush1.msra.mxu0 0.0
  %1404 = vmatprep.subr.mxu0 0.0
  %1405 = vmatpush1.msra.mxu0 0.0
  %1406 = vmatprep.subr.mxu0 0.0
  %1407 = vmatpush1.msra.mxu0 0.0
  %1408 = vmatprep.subr.mxu0 0.0
  %1409 = vmatpush1.msra.mxu0 0.0
  %1410 = vmatprep.subr.mxu0 0.0
  %1411 = vmatpush1.msra.mxu0 0.0
  %1412 = vmatprep.subr.mxu0 0.0
  %1413 = vmatpush1.msra.mxu0 0.0
  %1414 = vmatprep.subr.mxu0 0.0
  %1415 = vmatpush1.msra.mxu0 0.0
  %1416 = vmatprep.subr.mxu0 0.0
  %1417 = vmatpush1.msra.mxu0 0.0
  %1418 = vmatprep.subr.mxu0 0.0
  %1419 = vmatpush1.msra.mxu0 0.0
  %1420 = vmatprep.subr.mxu0 0.0
  %1421 = vmatpush1.msra.mxu0 0.0
  %1422 = vmatprep.subr.mxu0 0.0
  %1423 = vmatpush1.msra.mxu0 0.0
  %1424 = vmatprep.subr.mxu0 0.0
  %1425 = vmatpush1.msra.mxu0 0.0
  %1426 = vmatprep.subr.mxu0 0.0
  %1427 = vmatpush1.msra.mxu0 0.0
  %1428 = vmatprep.subr.mxu0 0.0
  %1429 = vmatpush1.msra.mxu0 0.0
  %1430 = vmatprep.mubr.f32.mxu0 0.0
  %1431 = vmatmul.mubr.f32.gmra.mrb[0].mxu0 %v422
  %v1432 = vpop.f32.mrb[0].mxu0
  %v1433 = vadd.f32 %v419, %v1432
  %v1434 = vpop.f32.mrb[0].mxu0
  %v1435 = vadd.f32 %v419, %v1434
  %1436 = vdwg.mxu0
  %v1437 = vmax.f32 %v1433, 0.0
  %v1438 = vmax.f32 %v1435, 0.0
  %v1439 = vmin.f32 %v1437, 6.0
  %v1440 = vmin.f32 %v1438, 6.0
  %1441 = vmatprep.subr.mxu0 %v1290
  %1442 = vmatpush1.msra.mxu0 %v1289
  %1443 = vmatprep.subr.mxu0 0.0
  %1444 = vmatpush1.msra.mxu0 0.0
  %1445 = vmatprep.subr.mxu0 0.0
  %1446 = vmatpush1.msra.mxu0 0.0
  %1447 = vmatprep.subr.mxu0 0.0
  %1448 = vmatpush1.msra.mxu0 0.0
  %1449 = vmatprep.subr.mxu0 0.0
  %1450 = vmatpush1.msra.mxu0 0.0
  %1451 = vmatprep.subr.mxu0 0.0
  %1452 = vmatpush1.msra.mxu0 0.0
  %1453 = vmatprep.subr.mxu0 0.0
  %1454 = vmatpush1.msra.mxu0 0.0
  %1455 = vmatprep.subr.mxu0 0.0
  %1456 = vmatpush1.msra.mxu0 0.0
  %1457 = vmatprep.subr.mxu0 0.0
  %1458 = vmatpush1.msra.mxu0 0.0
  %1459 = vmatprep.subr.mxu0 0.0
  %1460 = vmatpush1.msra.mxu0 0.0
  %1461 = vmatprep.subr.mxu0 0.0
  %1462 = vmatpush1.msra.mxu0 0.0
  %1463 = vmatprep.subr.mxu0 0.0
  %1464 = vmatpush1.msra.mxu0 0.0
  %1465 = vmatprep.subr.mxu0 0.0
  %1466 = vmatpush1.msra.mxu0 0.0
  %1467 = vmatprep.subr.mxu0 0.0
  %1468 = vmatpush1.msra.mxu0 0.0
  %1469 = vmatprep.subr.mxu0 0.0
  %1470 = vmatpush1.msra.mxu0 0.0
  %1471 = vmatprep.subr.mxu0 0.0
  %1472 = vmatpush1.msra.mxu0 0.0
  %1473 = vmatprep.subr.mxu0 0.0
  %1474 = vmatpush1.msra.mxu0 0.0
  %1475 = vmatprep.subr.mxu0 0.0
  %1476 = vmatpush1.msra.mxu0 0.0
  %1477 = vmatprep.subr.mxu0 0.0
  %1478 = vmatpush1.msra.mxu0 0.0
  %1479 = vmatprep.subr.mxu0 0.0
  %1480 = vmatpush1.msra.mxu0 0.0
  %1481 = vmatprep.subr.mxu0 0.0
  %1482 = vmatpush1.msra.mxu0 0.0
  %1483 = vmatprep.subr.mxu0 0.0
  %1484 = vmatpush1.msra.mxu0 0.0
  %1485 = vmatprep.subr.mxu0 0.0
  %1486 = vmatpush1.msra.mxu0 0.0
  %1487 = vmatprep.subr.mxu0 0.0
  %1488 = vmatpush1.msra.mxu0 0.0
  %1489 = vmatprep.subr.mxu0 0.0
  %1490 = vmatpush1.msra.mxu0 0.0
  %1491 = vmatprep.subr.mxu0 0.0
  %1492 = vmatpush1.msra.mxu0 0.0
  %1493 = vmatprep.subr.mxu0 0.0
  %1494 = vmatpush1.msra.mxu0 0.0
  %1495 = vmatprep.subr.mxu0 0.0
  %1496 = vmatpush1.msra.mxu0 0.0
  %1497 = vmatprep.subr.mxu0 0.0
  %1498 = vmatpush1.msra.mxu0 0.0
  %1499 = vmatprep.subr.mxu0 0.0
  %1500 = vmatpush1.msra.mxu0 0.0
  %1501 = vmatprep.subr.mxu0 0.0
  %1502 = vmatpush1.msra.mxu0 0.0
  %1503 = vmatprep.subr.mxu0 0.0
  %1504 = vmatpush1.msra.mxu0 0.0
  %1505 = vmatprep.mubr.f32.mxu0 0.0
  %1506 = vmatmul.mubr.f32.gmra.mrb[0].mxu0 %v422
  %v1507 = vpop.f32.mrb[0].mxu0
  %v1508 = vadd.f32 %v419, %v1507
  %v1509 = vpop.f32.mrb[0].mxu0
  %v1510 = vadd.f32 %v419, %v1509
  %1511 = vdwg.mxu0
  %v1512 = vmax.f32 %v1508, 0.0
  %v1513 = vmax.f32 %v1510, 0.0
  %v1514 = vmin.f32 %v1512, 6.0
  %v1515 = vmin.f32 %v1513, 6.0
  %1516 = vmatprep.subr.mxu0 %v1440
  %1517 = vmatpush1.msra.mxu0 %v1439
  %1518 = vmatprep.subr.mxu0 0.0
  %1519 = vmatpush1.msra.mxu0 0.0
  %1520 = vmatprep.subr.mxu0 0.0
  %1521 = vmatpush1.msra.mxu0 0.0
  %1522 = vmatprep.subr.mxu0 0.0
  %1523 = vmatpush1.msra.mxu0 0.0
  %1524 = vmatprep.subr.mxu0 0.0
  %1525 = vmatpush1.msra.mxu0 0.0
  %1526 = vmatprep.subr.mxu0 0.0
  %1527 = vmatpush1.msra.mxu0 0.0
  %1528 = vmatprep.subr.mxu0 0.0
  %1529 = vmatpush1.msra.mxu0 0.0
  %1530 = vmatprep.subr.mxu0 0.0
  %1531 = vmatpush1.msra.mxu0 0.0
  %1532 = vmatprep.subr.mxu0 0.0
  %1533 = vmatpush1.msra.mxu0 0.0
  %1534 = vmatprep.subr.mxu0 0.0
  %1535 = vmatpush1.msra.mxu0 0.0
  %1536 = vmatprep.subr.mxu0 0.0
  %1537 = vmatpush1.msra.mxu0 0.0
  %1538 = vmatprep.subr.mxu0 0.0
  %1539 = vmatpush1.msra.mxu0 0.0
  %1540 = vmatprep.subr.mxu0 0.0
  %1541 = vmatpush1.msra.mxu0 0.0
  %1542 = vmatprep.subr.mxu0 0.0
  %1543 = vmatpush1.msra.mxu0 0.0
  %1544 = vmatprep.subr.mxu0 0.0
  %1545 = vmatpush1.msra.mxu0 0.0
  %1546 = vmatprep.subr.mxu0 0.0
  %1547 = vmatpush1.msra.mxu0 0.0
  %1548 = vmatprep.subr.mxu0 0.0
  %1549 = vmatpush1.msra.mxu0 0.0
  %1550 = vmatprep.subr.mxu0 0.0
  %1551 = vmatpush1.msra.mxu0 0.0
  %1552 = vmatprep.subr.mxu0 0.0
  %1553 = vmatpush1.msra.mxu0 0.0
  %1554 = vmatprep.subr.mxu0 0.0
  %1555 = vmatpush1.msra.mxu0 0.0
  %1556 = vmatprep.subr.mxu0 0.0
  %1557 = vmatpush1.msra.mxu0 0.0
  %1558 = vmatprep.subr.mxu0 0.0
  %1559 = vmatpush1.msra.mxu0 0.0
  %1560 = vmatprep.subr.mxu0 0.0
  %1561 = vmatpush1.msra.mxu0 0.0
  %1562 = vmatprep.subr.mxu0 0.0
  %1563 = vmatpush1.msra.mxu0 0.0
  %1564 = vmatprep.subr.mxu0 0.0
  %1565 = vmatpush1.msra.mxu0 0.0
  %1566 = vmatprep.subr.mxu0 0.0
  %1567 = vmatpush1.msra.mxu0 0.0
  %1568 = vmatprep.subr.mxu0 0.0
  %1569 = vmatpush1.msra.mxu0 0.0
  %1570 = vmatprep.subr.mxu0 0.0
  %1571 = vmatpush1.msra.mxu0 0.0
  %1572 = vmatprep.subr.mxu0 0.0
  %1573 = vmatpush1.msra.mxu0 0.0
  %1574 = vmatprep.subr.mxu0 0.0
  %1575 = vmatpush1.msra.mxu0 0.0
  %1576 = vmatprep.subr.mxu0 0.0
  %1577 = vmatpush1.msra.mxu0 0.0
  %1578 = vmatprep.subr.mxu0 0.0
  %1579 = vmatpush1.msra.mxu0 0.0
  %1580 = vmatprep.mubr.f32.mxu0 0.0
  %1581 = vmatmul.mubr.f32.gmra.mrb[0].mxu0 %v650
  %v1582 = vpop.f32.mrb[0].mxu0
  %v1583 = vadd.f32 0.0, %v1582
  %v1584 = vpop.f32.mrb[0].mxu0
  %v1585 = vadd.f32 0.0, %v1584
  %1586 = vdwg.mxu0
  %1587 = vmatprep.subr.mxu0 %v1365
  %1588 = vmatpush1.msra.mxu0 %v1364
  %1589 = vmatprep.subr.mxu0 0.0
  %1590 = vmatpush1.msra.mxu0 0.0
  %1591 = vmatprep.subr.mxu0 0.0
  %1592 = vmatpush1.msra.mxu0 0.0
  %1593 = vmatprep.subr.mxu0 0.0
  %1594 = vmatpush1.msra.mxu0 0.0
  %1595 = vmatprep.subr.mxu0 0.0
  %1596 = vmatpush1.msra.mxu0 0.0
  %1597 = vmatprep.subr.mxu0 0.0
  %1598 = vmatpush1.msra.mxu0 0.0
  %1599 = vmatprep.subr.mxu0 0.0
  %1600 = vmatpush1.msra.mxu0 0.0
  %1601 = vmatprep.subr.mxu0 0.0
  %1602 = vmatpush1.msra.mxu0 0.0
  %1603 = vmatprep.subr.mxu0 0.0
  %1604 = vmatpush1.msra.mxu0 0.0
  %1605 = vmatprep.subr.mxu0 0.0
  %1606 = vmatpush1.msra.mxu0 0.0
  %1607 = vmatprep.subr.mxu0 0.0
  %1608 = vmatpush1.msra.mxu0 0.0
  %1609 = vmatprep.subr.mxu0 0.0
  %1610 = vmatpush1.msra.mxu0 0.0
  %1611 = vmatprep.subr.mxu0 0.0
  %1612 = vmatpush1.msra.mxu0 0.0
  %1613 = vmatprep.subr.mxu0 0.0
  %1614 = vmatpush1.msra.mxu0 0.0
  %1615 = vmatprep.subr.mxu0 0.0
  %1616 = vmatpush1.msra.mxu0 0.0
  %1617 = vmatprep.subr.mxu0 0.0
  %1618 = vmatpush1.msra.mxu0 0.0
  %1619 = vmatprep.subr.mxu0 0.0
  %1620 = vmatpush1.msra.mxu0 0.0
  %1621 = vmatprep.subr.mxu0 0.0
  %1622 = vmatpush1.msra.mxu0 0.0
  %1623 = vmatprep.subr.mxu0 0.0
  %1624 = vmatpush1.msra.mxu0 0.0
  %1625 = vmatprep.subr.mxu0 0.0
  %1626 = vmatpush1.msra.mxu0 0.0
  %1627 = vmatprep.subr.mxu0 0.0
  %1628 = vmatpush1.msra.mxu0 0.0
  %1629 = vmatprep.subr.mxu0 0.0
  %1630 = vmatpush1.msra.mxu0 0.0
  %1631 = vmatprep.subr.mxu0 0.0
  %1632 = vmatpush1.msra.mxu0 0.0
  %1633 = vmatprep.subr.mxu0 0.0
  %1634 = vmatpush1.msra.mxu0 0.0
  %1635 = vmatprep.subr.mxu0 0.0
  %1636 = vmatpush1.msra.mxu0 0.0
  %1637 = vmatprep.subr.mxu0 0.0
  %1638 = vmatpush1.msra.mxu0 0.0
  %1639 = vmatprep.subr.mxu0 0.0
  %1640 = vmatpush1.msra.mxu0 0.0
  %1641 = vmatprep.subr.mxu0 0.0
  %1642 = vmatpush1.msra.mxu0 0.0
  %1643 = vmatprep.subr.mxu0 0.0
  %1644 = vmatpush1.msra.mxu0 0.0
  %1645 = vmatprep.subr.mxu0 0.0
  %1646 = vmatpush1.msra.mxu0 0.0
  %1647 = vmatprep.subr.mxu0 0.0
  %1648 = vmatpush1.msra.mxu0 0.0
  %1649 = vmatprep.subr.mxu0 0.0
  %1650 = vmatpush1.msra.mxu0 0.0
  %1651 = vmatprep.mubr.f32.mxu0 0.0
  %1652 = vmatmul.mubr.f32.gmra.mrb[0].mxu0 %v724
  %v1653 = vpop.f32.mrb[0].mxu0
  %v1654 = vadd.f32 %v1583, %v1653
  %v1655 = vpop.f32.mrb[0].mxu0
  %v1656 = vadd.f32 %v1585, %v1655
  %1657 = vdwg.mxu0
  %1658 = vmatprep.subr.mxu0 %v1515
  %1659 = vmatpush1.msra.mxu0 %v1514
  %1660 = vmatprep.subr.mxu0 0.0
  %1661 = vmatpush1.msra.mxu0 0.0
  %1662 = vmatprep.subr.mxu0 0.0
  %1663 = vmatpush1.msra.mxu0 0.0
  %1664 = vmatprep.subr.mxu0 0.0
  %1665 = vmatpush1.msra.mxu0 0.0
  %1666 = vmatprep.subr.mxu0 0.0
  %1667 = vmatpush1.msra.mxu0 0.0
  %1668 = vmatprep.subr.mxu0 0.0
  %1669 = vmatpush1.msra.mxu0 0.0
  %1670 = vmatprep.subr.mxu0 0.0
  %1671 = vmatpush1.msra.mxu0 0.0
  %1672 = vmatprep.subr.mxu0 0.0
  %1673 = vmatpush1.msra.mxu0 0.0
  %1674 = vmatprep.subr.mxu0 0.0
  %1675 = vmatpush1.msra.mxu0 0.0
  %1676 = vmatprep.subr.mxu0 0.0
  %1677 = vmatpush1.msra.mxu0 0.0
  %1678 = vmatprep.subr.mxu0 0.0
  %1679 = vmatpush1.msra.mxu0 0.0
  %1680 = vmatprep.subr.mxu0 0.0
  %1681 = vmatpush1.msra.mxu0 0.0
  %1682 = vmatprep.subr.mxu0 0.0
  %1683 = vmatpush1.msra.mxu0 0.0
  %1684 = vmatprep.subr.mxu0 0.0
  %1685 = vmatpush1.msra.mxu0 0.0
  %1686 = vmatprep.subr.mxu0 0.0
  %1687 = vmatpush1.msra.mxu0 0.0
  %1688 = vmatprep.subr.mxu0 0.0
  %1689 = vmatpush1.msra.mxu0 0.0
  %1690 = vmatprep.subr.mxu0 0.0
  %1691 = vmatpush1.msra.mxu0 0.0
  %1692 = vmatprep.subr.mxu0 0.0
  %1693 = vmatpush1.msra.mxu0 0.0
  %1694 = vmatprep.subr.mxu0 0.0
  %1695 = vmatpush1.msra.mxu0 0.0
  %1696 = vmatprep.subr.mxu0 0.0
  %1697 = vmatpush1.msra.mxu0 0.0
  %1698 = vmatprep.subr.mxu0 0.0
  %1699 = vmatpush1.msra.mxu0 0.0
  %1700 = vmatprep.subr.mxu0 0.0
  %1701 = vmatpush1.msra.mxu0 0.0
  %1702 = vmatprep.subr.mxu0 0.0
  %1703 = vmatpush1.msra.mxu0 0.0
  %1704 = vmatprep.subr.mxu0 0.0
  %1705 = vmatpush1.msra.mxu0 0.0
  %1706 = vmatprep.subr.mxu0 0.0
  %1707 = vmatpush1.msra.mxu0 0.0
  %1708 = vmatprep.subr.mxu0 0.0
  %1709 = vmatpush1.msra.mxu0 0.0
  %1710 = vmatprep.subr.mxu0 0.0
  %1711 = vmatpush1.msra.mxu0 0.0
  %1712 = vmatprep.subr.mxu0 0.0
  %1713 = vmatpush1.msra.mxu0 0.0
  %1714 = vmatprep.subr.mxu0 0.0
  %1715 = vmatpush1.msra.mxu0 0.0
  %1716 = vmatprep.subr.mxu0 0.0
  %1717 = vmatpush1.msra.mxu0 0.0
  %1718 = vmatprep.subr.mxu0 0.0
  %1719 = vmatpush1.msra.mxu0 0.0
  %1720 = vmatprep.subr.mxu0 0.0
  %1721 = vmatpush1.msra.mxu0 0.0
  %1722 = vmatprep.mubr.f32.mxu0 0.0
  %1723 = vmatmul.mubr.f32.gmra.mrb[0].mxu0 %v798
  %v1724 = vpop.f32.mrb[0].mxu0
  %v1725 = vadd.f32 0.0, %v1724
  %v1726 = vpop.f32.mrb[0].mxu0
  %v1727 = vadd.f32 0.0, %v1726
  %1728 = vdwg.mxu0
  %v1729 = vadd.f32 %v1654, %v1725
  %v1730 = vadd.f32 %v1656, %v1727
  %v1731 = vadd.f32 %v1729, %v876
  %v1732 = vadd.f32 %v1730, %v876
  %v1735 = vrot.slane %v1731, 1
  %v1736 = vrot.slane %v1732, 1
  %v1739 = vmax.f32 %v1731, %v1735
  %v1740 = vmax.f32 %v1732, %v1736
  %v1741 = vrot.slane %v1731, 2
  %v1742 = vrot.slane %v1732, 2
  %v1745 = vmax.f32 %v1739, %v1741
  %v1746 = vmax.f32 %v1740, %v1742
  %v1747 = vsub.f32 %v1731, %v1745
  %v1748 = vsub.f32 %v1732, %v1746
  %v1749 = vmul.f32 %v1747, 1.442695
  %v1750 = vpow.pop %v1749
  %v1751 = vmul.f32 %v1748, 1.442695
  %v1752 = vpow.pop %v1751
  %v1755 = vrot.slane %v1745, 7
  %v1756 = vrot.slane %v1746, 7
  %v1759 = vsub.f32 %v1731, %v1755
  %v1760 = vsub.f32 %v1732, %v1756
  %v1761 = vmul.f32 %v1759, 1.442695
  %v1762 = vpow.pop %v1761
  %v1763 = vmul.f32 %v1760, 1.442695
  %v1764 = vpow.pop %v1763
  %v1765 = vrot.slane %v1745, 6
  %v1766 = vrot.slane %v1746, 6
  %v1769 = vsub.f32 %v1731, %v1765
  %v1770 = vsub.f32 %v1732, %v1766
  %v1771 = vmul.f32 %v1769, 1.442695
  %v1772 = vpow.pop %v1771
  %v1773 = vmul.f32 %v1770, 1.442695
  %v1774 = vpow.pop %v1773
  %v1777 = vrot.slane %v1762, 1
  %v1778 = vrot.slane %v1764, 1
  %v1781 = vadd.f32 %v1750, %v1777
  %v1782 = vadd.f32 %v1752, %v1778
  %v1785 = vrot.slane %v1772, 2
  %v1786 = vrot.slane %v1774, 2
  %v1789 = vadd.f32 %v1781, %v1785
  %v1790 = vadd.f32 %v1782, %v1786
  %v1791 = vrcp.pop %v1789
  %v1792 = vrcp.pop %v1790
  %v1793 = vmul.f32 %v1791, 2.0
  %v1794 = vmul.f32 %v1792, 2.0
  %v1795 = vmul.f32 %v1750, %v1793
  %v1796 = vmul.f32 %v1752, %v1794
  %v1797 = vlaneseq
  %v1798 = vshrl.u32 %v1797, 7
  %v1799 = vsub.s32 0, %v1798
  %v1800 = vrot.slane %v1795, %v1799
  %v1801 = vlaneseq
  %v1802 = vshrl.u32 %v1801, 7
  %v1803 = vsub.s32 0, %v1802
  %v1804 = vrot.slane %v1796, %v1803
  %v1805 = vmul.f32 %v1089, %v1800
  %v1806 = vmul.f32 %v1090, %v1804
  %v1809 = vrot.slane %v1793, 7
  %v1810 = vrot.slane %v1794, 7
  %v1813 = vmul.f32 %v1762, %v1809
  %v1814 = vmul.f32 %v1764, %v1810
  %v1815 = vlaneseq
  %v1816 = vshrl.u32 %v1815, 7
  %v1817 = vsub.s32 1, %v1816
  %v1818 = vrot.slane %v1813, %v1817
  %v1819 = vlaneseq
  %v1820 = vshrl.u32 %v1819, 7
  %v1821 = vsub.s32 1, %v1820
  %v1822 = vrot.slane %v1814, %v1821
  %v1823 = vmul.f32 %v1164, %v1818
  %v1824 = vmul.f32 %v1165, %v1822
  %v1825 = vadd.f32 %v1805, %v1823
  %v1826 = vadd.f32 %v1806, %v1824
  %v1827 = vrot.slane %v1793, 6
  %v1828 = vrot.slane %v1794, 6
  %v1831 = vmul.f32 %v1772, %v1827
  %v1832 = vmul.f32 %v1774, %v1828
  %v1833 = vlaneseq
  %v1834 = vshrl.u32 %v1833, 7
  %v1835 = vsub.s32 2, %v1834
  %v1836 = vrot.slane %v1831, %v1835
  %v1837 = vlaneseq
  %v1838 = vshrl.u32 %v1837, 7
  %v1839 = vsub.s32 2, %v1838
  %v1840 = vrot.slane %v1832, %v1839
  %v1841 = vmul.f32 %v1289, %v1836
  %v1842 = vmul.f32 %v1290, %v1840
  %v1843 = vadd.f32 %v1825, %v1841
  %v1844 = vadd.f32 %v1826, %v1842
  %s1845 = scalar_lea.vmem %s15, 16
  %1846 = vst [vmem:[%s1845] sm:$0xff] %v1843
  %1847 = vst [vmem:[%s1845 + $0x8] sm:$0xff] %v1844
  // Predicated region
  $region62: #{mobilenet_fuse.1} parent=0 // pred_check
    _
  $region63: #{mobilenet_fuse.1} parent=0 // pred_check_branch
    %1849 = sbr.rel (0) target = $region65
  $region64: #{mobilenet_fuse.1} parent=0 // pred_region
    _
  $region65: #{mobilenet_fuse.1} parent=0 // pred_fallthru
    _
  // Predicated region
  $region66: #{mobilenet_fuse.1} parent=0 // pred_check
    _
  $region67: #{mobilenet_fuse.1} parent=0 // pred_check_branch
    %1851 = sbr.rel (0) target = $region69
  $region68: #{mobilenet_fuse.1} parent=0 // pred_region
    _
  $region69: #{mobilenet_fuse.1} parent=0 // pred_fallthru
    _

</llo_original>
